<compile_context>
chip_gen: v5e
topology: v5e:2x2
jax: 0.10.0
libtpu: 0.0.40
codegen_flags: <defaults>
</compile_context>

<pallas_src>
import functools

import jax
import jax.numpy as jnp
from jax import lax
from jax.experimental import pallas as pl
from jax.experimental.pallas import tpu as pltpu


_LANE = 128
_FUSED_MAX_NODES = 1024   # single fused kernel per layer up to this padded size


def _round_up(x, m):
    return ((x + m - 1) // m) * m


def _vmem_limit_bytes():
    # Per-generation limit: ~96 MiB on v5e/v6e (128 MiB VMEM), ~48 MiB on v7x (64 MiB).
    try:
        return int(0.75 * pltpu.get_tpu_info().vmem_capacity_bytes)
    except Exception:
        return 48 * 1024 * 1024


_VMEM_LIMIT = _vmem_limit_bytes()


def _padded_num_nodes(n):
    if n <= 128:
        return 128
    if n <= 256:
        return 256
    if n <= 512:
        return 512
    return _round_up(n, 1024)


def _choose_tiles(n_pad):
    # Row tile: large, but keep rows = n_pad // tm >= 2 so the "parallel" row
    # axis can split across the 2 TensorCores on v7x.
    tm = max(128, min(1024, n_pad // 2))
    # Reduction tile (lane axis of the adjacency): as large as divisibility allows.
    tk = min(1024, n_pad)
    assert n_pad % tm == 0 and n_pad % tk == 0, (n_pad, tm, tk)
    return tm, tk


# ----------------------------- Pallas kernels ------------------------------ #

def _fused_layer_kernel(adj_ref, inv_ref, h_ref, w_ref, b_ref, out_ref, *, apply_relu):
    """Whole-layer kernel for small graphs: everything resident in VMEM.

    adj_ref: [N, N] int8 (0/1 mask)   inv_ref: [N, 1] f32 (1/indeg, 0 on pads)
    h_ref:   [N, Fin_pad] bf16        w_ref:   [Fin_pad, 2*Fout_pad] bf16
    b_ref:   [1, Fout_pad] f32        out_ref: [N, Fout_pad]
    """
    fout = b_ref.shape[-1]
    sp = jnp.dot(h_ref[...], w_ref[...], preferred_element_type=jnp.float32)
    s = sp[:, :fout] + b_ref[...]                       # self part + bias (f32)
    p = sp[:, fout:].astype(jnp.bfloat16)               # part to aggregate
    a = adj_ref[...].astype(jnp.bfloat16)               # 0/1 mask -> MXU operand
    c = jnp.dot(a, p, preferred_element_type=jnp.float32)
    z = s + c * inv_ref[...]                            # exact f32 1/indeg scale
    nsq = jnp.sum(z * z, axis=-1, keepdims=True)
    z = z * lax.rsqrt(jnp.maximum(nsq, 1e-24))          # == z / max(||z||, 1e-12)
    if apply_relu:
        z = jnp.maximum(z, 0.0)
    out_ref[...] = z.astype(out_ref.dtype)


def _project_kernel(h_ref, w_ref, b_ref, s_ref, p_ref):
    """Per-node projection: [s | p] = h @ [Wh | Wc] (+ bias on the s half).

    h_ref: [tm, Fin_pad] bf16   w_ref: [Fin_pad, 2*Fout_pad] bf16 (fused weight)
    b_ref: [1, Fout_pad] f32    s_ref: [tm, Fout_pad] f32   p_ref: [tm, Fout_pad] bf16
    """
    fout = s_ref.shape[-1]
    sp = jnp.dot(h_ref[...], w_ref[...], preferred_element_type=jnp.float32)
    s_ref[...] = (sp[:, :fout] + b_ref[...]).astype(s_ref.dtype)
    p_ref[...] = sp[:, fout:].astype(p_ref.dtype)


def _aggregate_kernel(adj_ref, p_ref, s_ref, inv_ref, out_ref, acc_ref, *,
                      tk, apply_relu):
    """z = s + (1/indeg) * (A_mask @ p), row-L2-normalize (+relu). Grid=(rows, k).

    adj_ref: [tm, tk] int8      p_ref: [N, Fout_pad] bf16 (VMEM-resident)
    s_ref:   [tm, Fout_pad] f32 inv_ref: [tm, 1] f32      acc_ref: [tm, Fout_pad] f32
    """
    k = pl.program_id(1)

    @pl.when(k == 0)
    def _():
        acc_ref[...] = jnp.zeros_like(acc_ref)

    start = pl.multiple_of(k * tk, tk)
    p_blk = p_ref[pl.ds(start, tk), :]
    acc_ref[...] += jnp.dot(adj_ref[...].astype(jnp.bfloat16), p_blk,
                            preferred_element_type=jnp.float32)

    @pl.when(k == pl.num_programs(1) - 1)
    def _():
        z = s_ref[...] + acc_ref[...] * inv_ref[...]
        nsq = jnp.sum(z * z, axis=-1, keepdims=True)
        z = z * lax.rsqrt(jnp.maximum(nsq, 1e-24))       # rsqrt -> EUP slot
        if apply_relu:
            z = jnp.maximum(z, 0.0)
        out_ref[...] = z.astype(out_ref.dtype)


# ------------------------------ Layer wrapper ------------------------------ #

def graphsage_layer(adj_i8, indeg_inv, h_pad, w_stacked, b_pad, *,
                    apply_relu, out_dtype):
    """One GraphSage layer (mean aggregator + Bundler)."""
    n_pad = adj_i8.shape[0]
    fin_pad = h_pad.shape[1]
    fout_pad = w_stacked.shape[1] // 2

    if n_pad <= _FUSED_MAX_NODES:
        # Small graph: one fused kernel, whole arrays resident in VMEM.
        return pl.pallas_call(
            functools.partial(_fused_layer_kernel, apply_relu=apply_relu),
            out_shape=jax.ShapeDtypeStruct((n_pad, fout_pad), out_dtype),
            compiler_params=pltpu.CompilerParams(vmem_limit_bytes=_VMEM_LIMIT),
        )(adj_i8, indeg_inv, h_pad, w_stacked, b_pad)

    tm, tk = _choose_tiles(n_pad)
    rows, ks = n_pad // tm, n_pad // tk
    assert rows * tm == n_pad and ks * tk == n_pad

    # Stage 1: per-node projection (cheap, row-tiled, single fused weight DMA).
    s, p = pl.pallas_call(
        _project_kernel,
        out_shape=(jax.ShapeDtypeStruct((n_pad, fout_pad), jnp.float32),
                   jax.ShapeDtypeStruct((n_pad, fout_pad), jnp.bfloat16)),
        grid=(rows,),
        in_specs=[
            pl.BlockSpec((tm, fin_pad), lambda i: (i, 0)),
            pl.BlockSpec((fin_pad, 2 * fout_pad), lambda i: (0, 0)),
            pl.BlockSpec((1, fout_pad), lambda i: (0, 0)),
        ],
        out_specs=(pl.BlockSpec((tm, fout_pad), lambda i: (i, 0)),
                   pl.BlockSpec((tm, fout_pad), lambda i: (i, 0))),
        compiler_params=pltpu.CompilerParams(
            dimension_semantics=("parallel",),
            vmem_limit_bytes=_VMEM_LIMIT),
    )(h_pad, w_stacked, b_pad)

    # Stage 2: neighbor-mean aggregation (dominant N^2 matmul), tiled + accumulated.
    #   adj: int8 0/1 mask tiles, triple-buffered.  p: VMEM-resident across rows.
    out = pl.pallas_call(
        functools.partial(_aggregate_kernel, tk=tk, apply_relu=apply_relu),
        out_shape=jax.ShapeDtypeStruct((n_pad, fout_pad), out_dtype),
        grid=(rows, ks),
        in_specs=[
            pl.BlockSpec((tm, tk), lambda i, k: (i, k),
                         pipeline_mode=pl.Buffered(3)),            # A mask tile
            pl.BlockSpec((n_pad, fout_pad), lambda i, k: (0, 0)),   # p resident
            pl.BlockSpec((tm, fout_pad), lambda i, k: (i, 0)),      # s row tile
            pl.BlockSpec((tm, 1), lambda i, k: (i, 0)),             # 1/indeg rows
        ],
        out_specs=pl.BlockSpec((tm, fout_pad), lambda i, k: (i, 0)),
        scratch_shapes=[pltpu.VMEM((tm, fout_pad), jnp.float32)],
        compiler_params=pltpu.CompilerParams(
            dimension_semantics=("parallel", "arbitrary"),
            vmem_limit_bytes=_VMEM_LIMIT),
    )(adj_i8, p, s, indeg_inv)
    return out


def graphsage_forward(adj_i8, indeg_inv, features_pad, prepared_params):
    """Full GraphSage forward on padded inputs; relu on all but the last layer."""
    h = features_pad
    last = len(prepared_params) - 1
    for i, (w_stacked, b_pad) in enumerate(prepared_params):
        is_last = (i == last)
        h = graphsage_layer(adj_i8, indeg_inv, h, w_stacked, b_pad,
                            apply_relu=not is_last,
                            out_dtype=jnp.float32 if is_last else jnp.bfloat16)
    return h


# ------------------------------ Parameter prep ----------------------------- #

def init_graphsage_params(key, in_feats, n_hidden, n_classes, n_layers):
    """PyTorch-layout params mirroring Bundler's Linear(2*in, out)."""
    dims = [(in_feats, n_hidden)]
    dims += [(n_hidden, n_hidden)] * (n_layers - 1)
    dims += [(n_hidden, n_classes)]
    params = []
    for (fin, fout) in dims:
        key, kw, kb = jax.random.split(key, 3)
        gain = jnp.sqrt(2.0)                              # xavier_uniform, relu gain
        limit = gain * jnp.sqrt(6.0 / (2 * fin + fout))
        w = jax.random.uniform(kw, (fout, 2 * fin), jnp.float32, -limit, limit)
        b = jax.random.uniform(kb, (fout,), jnp.float32, -0.1, 0.1)
        params.append((w, b))
    return params


def prepare_params(torch_params):
    """One-time (hoisted) transpose / split / zero-pad / stack of the weights.

    PyTorch w: [Fout, 2*Fin] acting on concat([h, c]).
    -> fused bf16 weight [Fin_pad, 2*Fout_pad] = [Wh_pad | Wc_pad], f32 bias [1, Fout_pad].
    """
    prepared = []
    for (w, b) in torch_params:
        fout, two_fin = w.shape
        fin = two_fin // 2
        fin_pad, fout_pad = _round_up(fin, _LANE), _round_up(fout, _LANE)
        wh = jnp.zeros((fin_pad, fout_pad), jnp.float32).at[:fin, :fout].set(w[:, :fin].T)
        wc = jnp.zeros((fin_pad, fout_pad), jnp.float32).at[:fin, :fout].set(w[:, fin:].T)
        w_stacked = jnp.concatenate([wh, wc], axis=1).astype(jnp.bfloat16)
        b_pad = jnp.zeros((1, fout_pad), jnp.float32).at[0, :fout].set(b)
        prepared.append((w_stacked, b_pad))
    return prepared


# ------------------------------ Graph helpers ------------------------------ #

def build_adjacency_mask(key, n_nodes):
    """Random directed 0/1 adjacency with a ring so every node has indeg >= 1."""
    rand = jax.random.bernoulli(key, p=0.3, shape=(n_nodes, n_nodes))
    adj = rand.astype(jnp.float32)
    adj = adj.at[jnp.diag_indices(n_nodes)].set(0.0)
    ring = jnp.roll(jnp.eye(n_nodes, dtype=jnp.float32), 1, axis=1)
    return jnp.maximum(adj, ring)


def prepare_graph(adj_mask, n_pad):
    """Pad the 0/1 mask to int8 [n_pad, n_pad]; exact f32 1/indeg column (0 on pads)."""
    n = adj_mask.shape[0]
    adj_i8 = jnp.zeros((n_pad, n_pad), jnp.int8).at[:n, :n].set(
        adj_mask.astype(jnp.int8))
    indeg = jnp.sum(adj_mask, axis=1)
    inv = jnp.where(indeg > 0, 1.0 / jnp.maximum(indeg, 1.0), 0.0)
    indeg_inv = jnp.zeros((n_pad, 1), jnp.float32).at[:n, 0].set(inv)
    return adj_i8, indeg_inv


def _pad2d(x, rows, cols, dtype):
    out = jnp.zeros((rows, cols), dtype)
    return out.at[:x.shape[0], :x.shape[1]].set(x.astype(dtype))


def graphsage_reference(adj_mask, features, torch_params):
    """Pure-JAX f32 reference of the PyTorch module (for validation)."""
    adj_norm = adj_mask / jnp.sum(adj_mask, axis=1, keepdims=True)
    h = features
    last = len(torch_params) - 1
    for i, (w, b) in enumerate(torch_params):
        c = adj_norm @ h
        z = jnp.concatenate([h, c], axis=1) @ w.T + b
        z = z / jnp.maximum(jnp.sqrt(jnp.sum(z * z, axis=1, keepdims=True)), 1e-12)
        if i != last:
            z = jnp.maximum(z, 0.0)
        h = z
    return h


# --------------------------------- main ------------------------------------ #

def _run_case(key, fwd, n_nodes, in_feats, n_hidden, n_classes, n_layers):
    k_graph, k_feat, k_param = jax.random.split(key, 3)
    adj_mask = build_adjacency_mask(k_graph, n_nodes)
    features = jax.random.normal(k_feat, (n_nodes, in_feats), jnp.float32)
    torch_params = init_graphsage_params(k_param, in_feats, n_hidden,
                                         n_classes, n_layers)

    # One-time padding / dtype prep (hoisted out of the forward path).
    n_pad = _padded_num_nodes(n_nodes)
    fin_pad = _round_up(in_feats, _LANE)
    adj_i8, indeg_inv = prepare_graph(adj_mask, n_pad)
    feat_pad = _pad2d(features, n_pad, fin_pad, jnp.bfloat16)
    prepared = prepare_params(torch_params)

    out_pad = jax.block_until_ready(fwd(adj_i8, indeg_inv, feat_pad, prepared))
    out = out_pad[:n_nodes, :n_classes]

    assert out.shape == (n_nodes, n_classes), out.shape
    assert bool(jnp.all(jnp.isfinite(out))), "non-finite output"

    # Validate against the f32 reference (loose tolerance: bf16 MXU inputs).
    ref = graphsage_reference(adj_mask, features, torch_params)
    max_err = float(jnp.max(jnp.abs(out - ref)))
    assert max_err < 0.1, f"mismatch vs f32 reference (N={n_nodes}): {max_err}"


if __name__ == "__main__":
    fwd = jax.jit(graphsage_forward)
    key = jax.random.PRNGKey(0)
    k_small, k_large = jax.random.split(key)

    # Demo-sized graph (n_pad=128) -> fused single-kernel-per-layer path.
    _run_case(k_small, fwd, n_nodes=16, in_feats=16, n_hidden=32,
              n_classes=8, n_layers=2)

    # Larger graph (n_pad=2048: rows=2, ks=2) -> tiled two-stage path with the
    # int8 mask, resident p, f32 s and the accumulator reduction grid.
    _run_case(k_large, fwd, n_nodes=1500, in_feats=16, n_hidden=32,
              n_classes=8, n_layers=2)

    print("KERNEL_OK")
</pallas_src>

<mosaic_0001>
module attributes {stable_mosaic.version = 11 : i64} {
  func.func @_fused_layer_kernel(%arg0: memref<128x128xi8, #tpu.memory_space<vmem>>, %arg1: memref<128x1xf32, #tpu.memory_space<vmem>>, %arg2: memref<128x128xbf16, #tpu.memory_space<vmem>>, %arg3: memref<128x256xbf16, #tpu.memory_space<vmem>>, %arg4: memref<1x128xf32, #tpu.memory_space<vmem>>, %arg5: memref<128x128xbf16, #tpu.memory_space<vmem>>) attributes {dimension_semantics = [], scalar_prefetch = 0 : i64, scratch_operands = 0 : i64, tpu.core_type = #tpu.core_type<tc>} {
    %c0 = arith.constant 0 : index
    %c0_0 = arith.constant 0 : index
    %0 = vector.load %arg2[%c0, %c0_0] : memref<128x128xbf16, #tpu.memory_space<vmem>>, vector<128x128xbf16>
    %c0_1 = arith.constant 0 : index
    %c0_2 = arith.constant 0 : index
    %1 = vector.load %arg3[%c0_1, %c0_2] : memref<128x256xbf16, #tpu.memory_space<vmem>>, vector<128x256xbf16>
    %cst = arith.constant dense<0.000000e+00> : vector<128x256xf32>
    %2 = tpu.matmul %0, %1, %cst {dimension_numbers = #tpu.dot_dimension_numbers<[1], [0], [0], [1], [0, 0, 1, 1], [], []>} : vector<128x128xbf16>, vector<128x256xbf16>, vector<128x256xf32> -> vector<128x256xf32>
    %3 = vector.extract_strided_slice %2 {offsets = [0, 0], sizes = [128, 128], strides = [1, 1]} : vector<128x256xf32> to vector<128x128xf32>
    %c0_3 = arith.constant 0 : index
    %c0_4 = arith.constant 0 : index
    %4 = vector.load %arg4[%c0_3, %c0_4] : memref<1x128xf32, #tpu.memory_space<vmem>>, vector<1x128xf32>
    %5 = vector.broadcast %4 : vector<1x128xf32> to vector<128x128xf32>
    %6 = arith.addf %3, %5 : vector<128x128xf32>
    %7 = vector.extract_strided_slice %2 {offsets = [0, 128], sizes = [128, 128], strides = [1, 1]} : vector<128x256xf32> to vector<128x128xf32>
    %8 = arith.truncf %7 : vector<128x128xf32> to vector<128x128xbf16>
    %c0_5 = arith.constant 0 : index
    %c0_6 = arith.constant 0 : index
    %9 = vector.load %arg0[%c0_5, %c0_6] : memref<128x128xi8, #tpu.memory_space<vmem>>, vector<128x128xi8>
    %10 = arith.sitofp %9 : vector<128x128xi8> to vector<128x128xbf16>
    %cst_7 = arith.constant dense<0.000000e+00> : vector<128x128xf32>
    %11 = tpu.matmul %10, %8, %cst_7 {dimension_numbers = #tpu.dot_dimension_numbers<[1], [0], [0], [1], [0, 0, 1, 1], [], []>} : vector<128x128xbf16>, vector<128x128xbf16>, vector<128x128xf32> -> vector<128x128xf32>
    %c0_8 = arith.constant 0 : index
    %c0_9 = arith.constant 0 : index
    %12 = vector.load %arg1[%c0_8, %c0_9] : memref<128x1xf32, #tpu.memory_space<vmem>>, vector<128x1xf32>
    %13 = vector.broadcast %12 : vector<128x1xf32> to vector<128x128xf32>
    %14 = arith.mulf %11, %13 : vector<128x128xf32>
    %15 = arith.addf %6, %14 : vector<128x128xf32>
    %16 = arith.mulf %15, %15 : vector<128x128xf32>
    %cst_10 = arith.constant dense<0.000000e+00> : vector<128xf32>
    %17 = vector.multi_reduction <add>, %16, %cst_10 [1] : vector<128x128xf32> to vector<128xf32>
    %18 = vector.shape_cast %17 : vector<128xf32> to vector<128x1xf32>
    %cst_11 = arith.constant 1.000000e-24 : f32
    %19 = vector.broadcast %cst_11 : f32 to vector<128x1xf32>
    %20 = arith.maximumf %18, %19 : vector<128x1xf32>
    %21 = math.rsqrt %20 : vector<128x1xf32>
    %22 = vector.broadcast %21 : vector<128x1xf32> to vector<128x128xf32>
    %23 = arith.mulf %15, %22 : vector<128x128xf32>
    %cst_12 = arith.constant 0.000000e+00 : f32
    %24 = vector.broadcast %cst_12 : f32 to vector<128x128xf32>
    %25 = arith.maximumf %23, %24 : vector<128x128xf32>
    %26 = arith.truncf %25 : vector<128x128xf32> to vector<128x128xbf16>
    %c0_13 = arith.constant 0 : index
    %c0_14 = arith.constant 0 : index
    %27 = vector.load %arg5[%c0_13, %c0_14] : memref<128x128xbf16, #tpu.memory_space<vmem>>, vector<128x128xbf16>
    tpu.vector_store %arg5[%c0_13, %c0_14], %26 {strides = array<i32>} : memref<128x128xbf16, #tpu.memory_space<vmem>>, vector<128x128xbf16>,
    return
  }
}

module attributes {stable_mosaic.version = 11 : i64} {
  func.func @_fused_layer_kernel(%arg0: memref<128x128xi8, #tpu.memory_space<vmem>>, %arg1: memref<128x1xf32, #tpu.memory_space<vmem>>, %arg2: memref<128x128xbf16, #tpu.memory_space<vmem>>, %arg3: memref<128x256xbf16, #tpu.memory_space<vmem>>, %arg4: memref<1x128xf32, #tpu.memory_space<vmem>>, %arg5: memref<128x128xf32, #tpu.memory_space<vmem>>) attributes {dimension_semantics = [], scalar_prefetch = 0 : i64, scratch_operands = 0 : i64, tpu.core_type = #tpu.core_type<tc>} {
    %c0 = arith.constant 0 : index
    %c0_0 = arith.constant 0 : index
    %0 = vector.load %arg2[%c0, %c0_0] : memref<128x128xbf16, #tpu.memory_space<vmem>>, vector<128x128xbf16>
    %c0_1 = arith.constant 0 : index
    %c0_2 = arith.constant 0 : index
    %1 = vector.load %arg3[%c0_1, %c0_2] : memref<128x256xbf16, #tpu.memory_space<vmem>>, vector<128x256xbf16>
    %cst = arith.constant dense<0.000000e+00> : vector<128x256xf32>
    %2 = tpu.matmul %0, %1, %cst {dimension_numbers = #tpu.dot_dimension_numbers<[1], [0], [0], [1], [0, 0, 1, 1], [], []>} : vector<128x128xbf16>, vector<128x256xbf16>, vector<128x256xf32> -> vector<128x256xf32>
    %3 = vector.extract_strided_slice %2 {offsets = [0, 0], sizes = [128, 128], strides = [1, 1]} : vector<128x256xf32> to vector<128x128xf32>
    %c0_3 = arith.constant 0 : index
    %c0_4 = arith.constant 0 : index
    %4 = vector.load %arg4[%c0_3, %c0_4] : memref<1x128xf32, #tpu.memory_space<vmem>>, vector<1x128xf32>
    %5 = vector.broadcast %4 : vector<1x128xf32> to vector<128x128xf32>
    %6 = arith.addf %3, %5 : vector<128x128xf32>
    %7 = vector.extract_strided_slice %2 {offsets = [0, 128], sizes = [128, 128], strides = [1, 1]} : vector<128x256xf32> to vector<128x128xf32>
    %8 = arith.truncf %7 : vector<128x128xf32> to vector<128x128xbf16>
    %c0_5 = arith.constant 0 : index
    %c0_6 = arith.constant 0 : index
    %9 = vector.load %arg0[%c0_5, %c0_6] : memref<128x128xi8, #tpu.memory_space<vmem>>, vector<128x128xi8>
    %10 = arith.sitofp %9 : vector<128x128xi8> to vector<128x128xbf16>
    %cst_7 = arith.constant dense<0.000000e+00> : vector<128x128xf32>
    %11 = tpu.matmul %10, %8, %cst_7 {dimension_numbers = #tpu.dot_dimension_numbers<[1], [0], [0], [1], [0, 0, 1, 1], [], []>} : vector<128x128xbf16>, vector<128x128xbf16>, vector<128x128xf32> -> vector<128x128xf32>
    %c0_8 = arith.constant 0 : index
    %c0_9 = arith.constant 0 : index
    %12 = vector.load %arg1[%c0_8, %c0_9] : memref<128x1xf32, #tpu.memory_space<vmem>>, vector<128x1xf32>
    %13 = vector.broadcast %12 : vector<128x1xf32> to vector<128x128xf32>
    %14 = arith.mulf %11, %13 : vector<128x128xf32>
    %15 = arith.addf %6, %14 : vector<128x128xf32>
    %16 = arith.mulf %15, %15 : vector<128x128xf32>
    %cst_10 = arith.constant dense<0.000000e+00> : vector<128xf32>
    %17 = vector.multi_reduction <add>, %16, %cst_10 [1] : vector<128x128xf32> to vector<128xf32>
    %18 = vector.shape_cast %17 : vector<128xf32> to vector<128x1xf32>
    %cst_11 = arith.constant 1.000000e-24 : f32
    %19 = vector.broadcast %cst_11 : f32 to vector<128x1xf32>
    %20 = arith.maximumf %18, %19 : vector<128x1xf32>
    %21 = math.rsqrt %20 : vector<128x1xf32>
    %22 = vector.broadcast %21 : vector<128x1xf32> to vector<128x128xf32>
    %23 = arith.mulf %15, %22 : vector<128x128xf32>
    %c0_12 = arith.constant 0 : index
    %c0_13 = arith.constant 0 : index
    %24 = vector.load %arg5[%c0_12, %c0_13] : memref<128x128xf32, #tpu.memory_space<vmem>>, vector<128x128xf32>
    tpu.vector_store %arg5[%c0_12, %c0_13], %23 {strides = array<i32>} : memref<128x128xf32, #tpu.memory_space<vmem>>, vector<128x128xf32>,
    return
  }
}

module attributes {stable_mosaic.version = 11 : i64} {
  func.func @_fused_layer_kernel(%arg0: memref<128x128xi8, #tpu.memory_space<vmem>>, %arg1: memref<128x1xf32, #tpu.memory_space<vmem>>, %arg2: memref<128x128xbf16, #tpu.memory_space<vmem>>, %arg3: memref<128x256xbf16, #tpu.memory_space<vmem>>, %arg4: memref<1x128xf32, #tpu.memory_space<vmem>>, %arg5: memref<128x128xbf16, #tpu.memory_space<vmem>>) attributes {dimension_semantics = [], scalar_prefetch = 0 : i64, scratch_operands = 0 : i64, tpu.core_type = #tpu.core_type<tc>} {
    %c0 = arith.constant 0 : index
    %c0_0 = arith.constant 0 : index
    %0 = vector.load %arg2[%c0, %c0_0] : memref<128x128xbf16, #tpu.memory_space<vmem>>, vector<128x128xbf16>
    %c0_1 = arith.constant 0 : index
    %c0_2 = arith.constant 0 : index
    %1 = vector.load %arg3[%c0_1, %c0_2] : memref<128x256xbf16, #tpu.memory_space<vmem>>, vector<128x256xbf16>
    %cst = arith.constant dense<0.000000e+00> : vector<128x256xf32>
    %2 = tpu.matmul %0, %1, %cst {dimension_numbers = #tpu.dot_dimension_numbers<[1], [0], [0], [1], [0, 0, 1, 1], [], []>} : vector<128x128xbf16>, vector<128x256xbf16>, vector<128x256xf32> -> vector<128x256xf32>
    %3 = vector.extract_strided_slice %2 {offsets = [0, 0], sizes = [128, 128], strides = [1, 1]} : vector<128x256xf32> to vector<128x128xf32>
    %c0_3 = arith.constant 0 : index
    %c0_4 = arith.constant 0 : index
    %4 = vector.load %arg4[%c0_3, %c0_4] : memref<1x128xf32, #tpu.memory_space<vmem>>, vector<1x128xf32>
    %5 = vector.broadcast %4 : vector<1x128xf32> to vector<128x128xf32>
    %6 = arith.addf %3, %5 : vector<128x128xf32>
    %7 = vector.extract_strided_slice %2 {offsets = [0, 128], sizes = [128, 128], strides = [1, 1]} : vector<128x256xf32> to vector<128x128xf32>
    %8 = arith.truncf %7 : vector<128x128xf32> to vector<128x128xbf16>
    %c0_5 = arith.constant 0 : index
    %c0_6 = arith.constant 0 : index
    %9 = vector.load %arg0[%c0_5, %c0_6] : memref<128x128xi8, #tpu.memory_space<vmem>>, vector<128x128xi8>
    %10 = arith.sitofp %9 : vector<128x128xi8> to vector<128x128xbf16>
    %cst_7 = arith.constant dense<0.000000e+00> : vector<128x128xf32>
    %11 = tpu.matmul %10, %8, %cst_7 {dimension_numbers = #tpu.dot_dimension_numbers<[1], [0], [0], [1], [0, 0, 1, 1], [], []>} : vector<128x128xbf16>, vector<128x128xbf16>, vector<128x128xf32> -> vector<128x128xf32>
    %c0_8 = arith.constant 0 : index
    %c0_9 = arith.constant 0 : index
    %12 = vector.load %arg1[%c0_8, %c0_9] : memref<128x1xf32, #tpu.memory_space<vmem>>, vector<128x1xf32>
    %13 = vector.broadcast %12 : vector<128x1xf32> to vector<128x128xf32>
    %14 = arith.mulf %11, %13 : vector<128x128xf32>
    %15 = arith.addf %6, %14 : vector<128x128xf32>
    %16 = arith.mulf %15, %15 : vector<128x128xf32>
    %cst_10 = arith.constant dense<0.000000e+00> : vector<128xf32>
    %17 = vector.multi_reduction <add>, %16, %cst_10 [1] : vector<128x128xf32> to vector<128xf32>
    %18 = vector.shape_cast %17 : vector<128xf32> to vector<128x1xf32>
    %cst_11 = arith.constant 1.000000e-24 : f32
    %19 = vector.broadcast %cst_11 : f32 to vector<128x1xf32>
    %20 = arith.maximumf %18, %19 : vector<128x1xf32>
    %21 = math.rsqrt %20 : vector<128x1xf32>
    %22 = vector.broadcast %21 : vector<128x1xf32> to vector<128x128xf32>
    %23 = arith.mulf %15, %22 : vector<128x128xf32>
    %cst_12 = arith.constant 0.000000e+00 : f32
    %24 = vector.broadcast %cst_12 : f32 to vector<128x128xf32>
    %25 = arith.maximumf %23, %24 : vector<128x128xf32>
    %26 = arith.truncf %25 : vector<128x128xf32> to vector<128x128xbf16>
    %c0_13 = arith.constant 0 : index
    %c0_14 = arith.constant 0 : index
    %27 = vector.load %arg5[%c0_13, %c0_14] : memref<128x128xbf16, #tpu.memory_space<vmem>>, vector<128x128xbf16>
    tpu.vector_store %arg5[%c0_13, %c0_14], %26 {strides = array<i32>} : memref<128x128xbf16, #tpu.memory_space<vmem>>, vector<128x128xbf16>,
    return
  }
}

</mosaic_0001>

<llo_original>
// kernel: graphsage_forward.4
$region0: #{graphsage_forward.4}
  #allocation0 [shape = 'u32[]', space=smem, size = 0x4, offset = 0x4, fixed_abs, tag = 'smem constant byte address 0x4 - core index']
  #allocation1 [shape = 'u32[72,128]{1,0:T(1,128)}', space=vmem, size = 0x9000, scoped, tag = 'internal scratch']
  %s0 = inlined_call_operand.hbm [shape: s8[128,128], index: 0, kind: input, shape index: {}]
  %s1 = inlined_call_operand.vmem [shape: f32[128,1], index: 1, kind: input, shape index: {}]
  %s2 = inlined_call_operand.vmem [shape: bf16[128,128], index: 2, kind: input, shape index: {}]
  %s3 = inlined_call_operand.hbm [shape: bf16[128,256], index: 3, kind: input, shape index: {}]
  %s4 = inlined_call_operand.vmem [shape: f32[1,128], index: 4, kind: input, shape index: {}]
  %s5 = inlined_call_operand.vmem [shape: bf16[128,128], index: 5, kind: output, shape index: {}]
  %s6 = sld [smem:[#allocation0]]
  $region38: #{graphsage_forward.4} parent=0
    _
  %s8 = ssub.s32 1, %s6
  %s9 = scalar_select 0, %s8, %s6
  $region1: #{graphsage_forward.4} parent=0
    #allocation2 [shape = 'u8[16384]{0}', space=vmem, size = 0x4000, scoped, tag = 'input window, operand 0, single buffered']
    #allocation3 [shape = 's32[1]{0}', space=sflag, size = 0x4, scoped, tag = 'scoped memory for graphsage_forward.4']
    #allocation4 [shape = 'u8[65536]{0}', space=vmem, size = 0x10000, scoped, tag = 'input window, operand 3, single buffered']
    #allocation5 [shape = 's32[1]{0}', space=sflag, size = 0x4, scoped, tag = 'scoped memory for graphsage_forward.4']
    %10 = vsyncpa [#allocation3], 0
    %11 = vsyncpa [#allocation5], 0
    // Predicated region
    $region2: #{graphsage_forward.4} parent=1 // pred_check
      _
    $region3: #{graphsage_forward.4} parent=1 // pred_check_branch
      %13 = sbr.rel (0) target = $region5
    $region4: #{graphsage_forward.4} parent=1 // pred_region
      %15 = vsyncadd [#allocation3], 0
      %s16 = sshll.u32 %s0, 4
      %s17 = int_to_ptr.hbm [resolvable:$true] %s16
      %s18 = sshll.u32 [#allocation2], 4
      %s19 = int_to_ptr.vmem [resolvable:$true] %s18
      %24 = dma.hbm_to_vmem [thread:$0]  %s17, 512, %s19, [#allocation3], 128, 128, 8
    $region5: #{graphsage_forward.4} parent=1 // pred_fallthru
      _
    // Predicated region
    $region6: #{graphsage_forward.4} parent=1 // pred_check
      _
    $region7: #{graphsage_forward.4} parent=1 // pred_check_branch
      %26 = sbr.rel (0) target = $region9
    $region8: #{graphsage_forward.4} parent=1 // pred_region
      _
    $region9: #{graphsage_forward.4} parent=1 // pred_fallthru
      _
    // Predicated region
    $region10: #{graphsage_forward.4} parent=1 // pred_check
      _
    $region11: #{graphsage_forward.4} parent=1 // pred_check_branch
      %28 = sbr.rel (0) target = $region13
    $region12: #{graphsage_forward.4} parent=1 // pred_region
      _
    $region13: #{graphsage_forward.4} parent=1 // pred_fallthru
      _
    // Predicated region
    $region14: #{graphsage_forward.4} parent=1 // pred_check
      _
    $region15: #{graphsage_forward.4} parent=1 // pred_check_branch
      %30 = sbr.rel (0) target = $region17
    $region16: #{graphsage_forward.4} parent=1 // pred_region
      %32 = vsyncadd [#allocation5], 0
      %s33 = sshll.u32 %s3, 4
      %s34 = int_to_ptr.hbm [resolvable:$true] %s33
      %s35 = sshll.u32 [#allocation4], 4
      %s36 = int_to_ptr.vmem [resolvable:$true] %s35
      %41 = dma.hbm_to_vmem [thread:$0]  %s34, 2048, %s36, [#allocation5], 128, 128, 8
    $region17: #{graphsage_forward.4} parent=1 // pred_fallthru
      _
    // Predicated region
    $region18: #{graphsage_forward.4} parent=1 // pred_check
      _
    $region19: #{graphsage_forward.4} parent=1 // pred_check_branch
      %43 = sbr.rel (0) target = $region21
    $region20: #{graphsage_forward.4} parent=1 // pred_region
      _
    $region21: #{graphsage_forward.4} parent=1 // pred_fallthru
      _
    // Predicated region
    $region22: #{graphsage_forward.4} parent=1 // pred_check
      _
    $region23: #{graphsage_forward.4} parent=1 // pred_check_branch
      %45 = sbr.rel (0) target = $region25
    $region24: #{graphsage_forward.4} parent=1 // pred_region
      %47 = dma.done [#allocation3], 512
    $region25: #{graphsage_forward.4} parent=1 // pred_fallthru
      _
    // Predicated region
    $region26: #{graphsage_forward.4} parent=1 // pred_check
      _
    $region27: #{graphsage_forward.4} parent=1 // pred_check_branch
      %49 = sbr.rel (0) target = $region29
    $region28: #{graphsage_forward.4} parent=1 // pred_region
      %51 = dma.done [#allocation5], 2048
    $region29: #{graphsage_forward.4} parent=1 // pred_fallthru
      _
    %v52 = vld [vmem:[%s2] sm:$0xf]
    %v53 = vld [vmem:[%s2 + $0x4] sm:$0xf]
    %v54 = vld [vmem:[%s2 + $0x8] sm:$0xf]
    %v55 = vld [vmem:[%s2 + $0xc] sm:$0xf]
    %v56 = vld [vmem:[%s2 + $0x10] sm:$0xf]
    %v57 = vld [vmem:[%s2 + $0x14] sm:$0xf]
    %v58 = vld [vmem:[%s2 + $0x18] sm:$0xf]
    %v59 = vld [vmem:[%s2 + $0x1c] sm:$0xf]
    %v60 = vld [vmem:[%s2 + $0x20] sm:$0xf]
    %v61 = vld [vmem:[%s2 + $0x24] sm:$0xf]
    %v62 = vld [vmem:[%s2 + $0x28] sm:$0xf]
    %v63 = vld [vmem:[%s2 + $0x2c] sm:$0xf]
    %v64 = vld [vmem:[%s2 + $0x30] sm:$0xf]
    %v65 = vld [vmem:[%s2 + $0x34] sm:$0xf]
    %v66 = vld [vmem:[%s2 + $0x38] sm:$0xf]
    %v67 = vld [vmem:[%s2 + $0x3c] sm:$0xf]
    %v68 = vld [vmem:[#allocation4] sm:$0xff]
    %v69 = vld [vmem:[#allocation4 + $0x8] sm:$0xff]
    %v70 = vld [vmem:[#allocation4 + $0x10] sm:$0xff]
    %v71 = vld [vmem:[#allocation4 + $0x18] sm:$0xff]
    %v72 = vld [vmem:[#allocation4 + $0x20] sm:$0xff]
    %v73 = vld [vmem:[#allocation4 + $0x28] sm:$0xff]
    %v74 = vld [vmem:[#allocation4 + $0x30] sm:$0xff]
    %v75 = vld [vmem:[#allocation4 + $0x38] sm:$0xff]
    %v76 = vld [vmem:[#allocation4 + $0x40] sm:$0xff]
    %v77 = vld [vmem:[#allocation4 + $0x48] sm:$0xff]
    %v78 = vld [vmem:[#allocation4 + $0x50] sm:$0xff]
    %v79 = vld [vmem:[#allocation4 + $0x58] sm:$0xff]
    %v80 = vld [vmem:[#allocation4 + $0x60] sm:$0xff]
    %v81 = vld [vmem:[#allocation4 + $0x68] sm:$0xff]
    %v82 = vld [vmem:[#allocation4 + $0x70] sm:$0xff]
    %v83 = vld [vmem:[#allocation4 + $0x78] sm:$0xff]
    %v100 = vunpack.c.l.b16 %v52
    %v101 = vunpack.c.l.b16 %v53
    %v102 = vunpack.c.l.b16 %v54
    %v103 = vunpack.c.l.b16 %v55
    %v104 = vunpack.c.l.b16 %v56
    %v105 = vunpack.c.l.b16 %v57
    %v106 = vunpack.c.l.b16 %v58
    %v107 = vunpack.c.l.b16 %v59
    %v108 = vunpack.c.l.b16 %v60
    %v109 = vunpack.c.l.b16 %v61
    %v110 = vunpack.c.l.b16 %v62
    %v111 = vunpack.c.l.b16 %v63
    %v112 = vunpack.c.l.b16 %v64
    %v113 = vunpack.c.l.b16 %v65
    %v114 = vunpack.c.l.b16 %v66
    %v115 = vunpack.c.l.b16 %v67
    %v116 = vpack.c.b16 %v101, %v100
    %v117 = vpack.c.b16 %v103, %v102
    %v118 = vpack.c.b16 %v105, %v104
    %v119 = vpack.c.b16 %v107, %v106
    %v120 = vpack.c.b16 %v109, %v108
    %v121 = vpack.c.b16 %v111, %v110
    %v122 = vpack.c.b16 %v113, %v112
    %v123 = vpack.c.b16 %v115, %v114
    %v148 = vunpack.c.l.b16 %v68
    %v149 = vunpack.c.h.b16 %v68
    %v150 = vunpack.c.l.b16 %v69
    %v151 = vunpack.c.h.b16 %v69
    %v152 = vunpack.c.l.b16 %v70
    %v153 = vunpack.c.h.b16 %v70
    %v154 = vunpack.c.l.b16 %v71
    %v155 = vunpack.c.h.b16 %v71
    %v156 = vunpack.c.l.b16 %v72
    %v157 = vunpack.c.h.b16 %v72
    %v158 = vunpack.c.l.b16 %v73
    %v159 = vunpack.c.h.b16 %v73
    %v160 = vunpack.c.l.b16 %v74
    %v161 = vunpack.c.h.b16 %v74
    %v162 = vunpack.c.l.b16 %v75
    %v163 = vunpack.c.h.b16 %v75
    %v164 = vunpack.c.l.b16 %v76
    %v165 = vunpack.c.h.b16 %v76
    %v166 = vunpack.c.l.b16 %v77
    %v167 = vunpack.c.h.b16 %v77
    %v168 = vunpack.c.l.b16 %v78
    %v169 = vunpack.c.h.b16 %v78
    %v170 = vunpack.c.l.b16 %v79
    %v171 = vunpack.c.h.b16 %v79
    %v172 = vunpack.c.l.b16 %v80
    %v173 = vunpack.c.h.b16 %v80
    %v174 = vunpack.c.l.b16 %v81
    %v175 = vunpack.c.h.b16 %v81
    %v176 = vunpack.c.l.b16 %v82
    %v177 = vunpack.c.h.b16 %v82
    %v178 = vunpack.c.l.b16 %v83
    %v179 = vunpack.c.h.b16 %v83
    %v180 = vpack.c.b16 %v150, %v148
    %v181 = vpack.c.b16 %v151, %v149
    %v182 = vpack.c.b16 %v154, %v152
    %v183 = vpack.c.b16 %v155, %v153
    %v184 = vpack.c.b16 %v158, %v156
    %v185 = vpack.c.b16 %v159, %v157
    %v186 = vpack.c.b16 %v162, %v160
    %v187 = vpack.c.b16 %v163, %v161
    %v188 = vpack.c.b16 %v166, %v164
    %v189 = vpack.c.b16 %v167, %v165
    %v190 = vpack.c.b16 %v170, %v168
    %v191 = vpack.c.b16 %v171, %v169
    %v192 = vpack.c.b16 %v174, %v172
    %v193 = vpack.c.b16 %v175, %v173
    %v194 = vpack.c.b16 %v178, %v176
    %v195 = vpack.c.b16 %v179, %v177
    %212 = vmatpush.bf16.msra.mxu0 %v194
    %213 = vmatpush.bf16.msra.mxu0 %v192
    %214 = vmatpush.bf16.msra.mxu0 %v190
    %215 = vmatpush.bf16.msra.mxu0 %v188
    %216 = vmatpush.bf16.msra.mxu0 %v186
    %217 = vmatpush.bf16.msra.mxu0 %v184
    %218 = vmatpush.bf16.msra.mxu0 %v182
    %219 = vmatpush.bf16.msra.mxu0 %v180
    %220 = vmatmul.bf16.gmra.mxu0 %v116
    %v221 = vpop.f32.mrf.mxu0
    %v222 = vadd.f32 0.0, %v221
    %v223 = vpop.f32.mrf.mxu0
    %v224 = vadd.f32 0.0, %v223
    %225 = vmatmul.bf16.gmra.mxu0 %v117
    %v226 = vpop.f32.mrf.mxu0
    %v227 = vadd.f32 0.0, %v226
    %v228 = vpop.f32.mrf.mxu0
    %v229 = vadd.f32 0.0, %v228
    %230 = vmatmul.bf16.gmra.mxu0 %v118
    %v231 = vpop.f32.mrf.mxu0
    %v232 = vadd.f32 0.0, %v231
    %v233 = vpop.f32.mrf.mxu0
    %v234 = vadd.f32 0.0, %v233
    %235 = vmatmul.bf16.gmra.mxu0 %v119
    %v236 = vpop.f32.mrf.mxu0
    %v237 = vadd.f32 0.0, %v236
    %v238 = vpop.f32.mrf.mxu0
    %v239 = vadd.f32 0.0, %v238
    %240 = vmatmul.bf16.gmra.mxu0 %v120
    %v241 = vpop.f32.mrf.mxu0
    %v242 = vadd.f32 0.0, %v241
    %v243 = vpop.f32.mrf.mxu0
    %v244 = vadd.f32 0.0, %v243
    %245 = vmatmul.bf16.gmra.mxu0 %v121
    %v246 = vpop.f32.mrf.mxu0
    %v247 = vadd.f32 0.0, %v246
    %v248 = vpop.f32.mrf.mxu0
    %v249 = vadd.f32 0.0, %v248
    %250 = vmatmul.bf16.gmra.mxu0 %v122
    %v251 = vpop.f32.mrf.mxu0
    %v252 = vadd.f32 0.0, %v251
    %v253 = vpop.f32.mrf.mxu0
    %v254 = vadd.f32 0.0, %v253
    %255 = vmatmul.bf16.gmra.mxu0 %v123
    %v256 = vpop.f32.mrf.mxu0
    %v257 = vadd.f32 0.0, %v256
    %v258 = vpop.f32.mrf.mxu0
    %v259 = vadd.f32 0.0, %v258
    %260 = vdwg.mxu0
    %261 = vmatpush.bf16.msra.mxu0 %v195
    %262 = vmatpush.bf16.msra.mxu0 %v193
    %263 = vmatpush.bf16.msra.mxu0 %v191
    %264 = vmatpush.bf16.msra.mxu0 %v189
    %265 = vmatpush.bf16.msra.mxu0 %v187
    %266 = vmatpush.bf16.msra.mxu0 %v185
    %267 = vmatpush.bf16.msra.mxu0 %v183
    %268 = vmatpush.bf16.msra.mxu0 %v181
    %269 = vmatmul.bf16.gmra.mxu0 %v116
    %v270 = vpop.f32.mrf.mxu0
    %v271 = vadd.f32 0.0, %v270
    %v272 = vpop.f32.mrf.mxu0
    %v273 = vadd.f32 0.0, %v272
    %274 = vmatmul.bf16.gmra.mxu0 %v117
    %v275 = vpop.f32.mrf.mxu0
    %v276 = vadd.f32 0.0, %v275
    %v277 = vpop.f32.mrf.mxu0
    %v278 = vadd.f32 0.0, %v277
    %279 = vmatmul.bf16.gmra.mxu0 %v118
    %v280 = vpop.f32.mrf.mxu0
    %v281 = vadd.f32 0.0, %v280
    %v282 = vpop.f32.mrf.mxu0
    %v283 = vadd.f32 0.0, %v282
    %284 = vmatmul.bf16.gmra.mxu0 %v119
    %v285 = vpop.f32.mrf.mxu0
    %v286 = vadd.f32 0.0, %v285
    %v287 = vpop.f32.mrf.mxu0
    %v288 = vadd.f32 0.0, %v287
    %289 = vmatmul.bf16.gmra.mxu0 %v120
    %v290 = vpop.f32.mrf.mxu0
    %v291 = vadd.f32 0.0, %v290
    %v292 = vpop.f32.mrf.mxu0
    %v293 = vadd.f32 0.0, %v292
    %294 = vmatmul.bf16.gmra.mxu0 %v121
    %v295 = vpop.f32.mrf.mxu0
    %v296 = vadd.f32 0.0, %v295
    %v297 = vpop.f32.mrf.mxu0
    %v298 = vadd.f32 0.0, %v297
    %299 = vmatmul.bf16.gmra.mxu0 %v122
    %v300 = vpop.f32.mrf.mxu0
    %v301 = vadd.f32 0.0, %v300
    %v302 = vpop.f32.mrf.mxu0
    %v303 = vadd.f32 0.0, %v302
    %304 = vmatmul.bf16.gmra.mxu0 %v123
    %v305 = vpop.f32.mrf.mxu0
    %v306 = vadd.f32 0.0, %v305
    %v307 = vpop.f32.mrf.mxu0
    %v308 = vadd.f32 0.0, %v307
    %309 = vdwg.mxu0
    %v310 = vld [vmem:[%s4] sm:$0x1]
    %v312 = vperm.slane %v310, 0
    %v314 = vadd.f32 %v222, %v312
    %v315 = vadd.f32 %v224, %v312
    %v316 = vadd.f32 %v227, %v312
    %v317 = vadd.f32 %v229, %v312
    %v318 = vadd.f32 %v232, %v312
    %v319 = vadd.f32 %v234, %v312
    %v320 = vadd.f32 %v237, %v312
    %v321 = vadd.f32 %v239, %v312
    %v322 = vadd.f32 %v242, %v312
    %v323 = vadd.f32 %v244, %v312
    %v324 = vadd.f32 %v247, %v312
    %v325 = vadd.f32 %v249, %v312
    %v326 = vadd.f32 %v252, %v312
    %v327 = vadd.f32 %v254, %v312
    %v328 = vadd.f32 %v257, %v312
    %v329 = vadd.f32 %v259, %v312
    %v330 = vpack.c.bf16 %v273, %v271
    %v331 = vpack.c.bf16 %v278, %v276
    %v332 = vpack.c.bf16 %v283, %v281
    %v333 = vpack.c.bf16 %v288, %v286
    %v334 = vpack.c.bf16 %v293, %v291
    %v335 = vpack.c.bf16 %v298, %v296
    %v336 = vpack.c.bf16 %v303, %v301
    %v337 = vpack.c.bf16 %v308, %v306
    %v338 = vld [vmem:[#allocation2] sm:$0xff]
    %v339 = vld [vmem:[#allocation2 + $0x8] sm:$0xff]
    %v340 = vld [vmem:[#allocation2 + $0x10] sm:$0xff]
    %v341 = vld [vmem:[#allocation2 + $0x18] sm:$0xff]
    %v342 = vunpack.c.0.s8 %v338
    %v343 = vunpack.c.1.s8 %v338
    %v344 = vunpack.c.2.s8 %v338
    %v345 = vunpack.c.3.s8 %v338
    %v346 = vunpack.c.0.s8 %v339
    %v347 = vunpack.c.1.s8 %v339
    %v348 = vunpack.c.2.s8 %v339
    %v349 = vunpack.c.3.s8 %v339
    %v350 = vunpack.c.0.s8 %v340
    %v351 = vunpack.c.1.s8 %v340
    %v352 = vunpack.c.2.s8 %v340
    %v353 = vunpack.c.3.s8 %v340
    %v354 = vunpack.c.0.s8 %v341
    %v355 = vunpack.c.1.s8 %v341
    %v356 = vunpack.c.2.s8 %v341
    %v357 = vunpack.c.3.s8 %v341
    %v358 = vcvt.s32.f32 %v342
    %v359 = vcvt.s32.f32 %v343
    %v360 = vcvt.s32.f32 %v344
    %v361 = vcvt.s32.f32 %v345
    %v362 = vcvt.s32.f32 %v346
    %v363 = vcvt.s32.f32 %v347
    %v364 = vcvt.s32.f32 %v348
    %v365 = vcvt.s32.f32 %v349
    %v366 = vcvt.s32.f32 %v350
    %v367 = vcvt.s32.f32 %v351
    %v368 = vcvt.s32.f32 %v352
    %v369 = vcvt.s32.f32 %v353
    %v370 = vcvt.s32.f32 %v354
    %v371 = vcvt.s32.f32 %v355
    %v372 = vcvt.s32.f32 %v356
    %v373 = vcvt.s32.f32 %v357
    %v374 = vpack.c.bf16 %v359, %v358
    %v375 = vpack.c.bf16 %v361, %v360
    %v376 = vpack.c.bf16 %v363, %v362
    %v377 = vpack.c.bf16 %v365, %v364
    %v378 = vpack.c.bf16 %v367, %v366
    %v379 = vpack.c.bf16 %v369, %v368
    %v380 = vpack.c.bf16 %v371, %v370
    %v381 = vpack.c.bf16 %v373, %v372
    %382 = vmatpush.bf16.msra.mxu0 %v337
    %383 = vmatpush.bf16.msra.mxu0 %v336
    %384 = vmatpush.bf16.msra.mxu0 %v335
    %385 = vmatpush.bf16.msra.mxu0 %v334
    %386 = vmatpush.bf16.msra.mxu0 %v333
    %387 = vmatpush.bf16.msra.mxu0 %v332
    %388 = vmatpush.bf16.msra.mxu0 %v331
    %389 = vmatpush.bf16.msra.mxu0 %v330
    %390 = vmatmul.bf16.gmra.mxu0 %v374
    %v391 = vpop.f32.mrf.mxu0
    %v392 = vadd.f32 0.0, %v391
    %v393 = vpop.f32.mrf.mxu0
    %v394 = vadd.f32 0.0, %v393
    %395 = vmatmul.bf16.gmra.mxu0 %v375
    %v396 = vpop.f32.mrf.mxu0
    %v397 = vadd.f32 0.0, %v396
    %v398 = vpop.f32.mrf.mxu0
    %v399 = vadd.f32 0.0, %v398
    %400 = vmatmul.bf16.gmra.mxu0 %v376
    %v401 = vpop.f32.mrf.mxu0
    %v402 = vadd.f32 0.0, %v401
    %v403 = vpop.f32.mrf.mxu0
    %v404 = vadd.f32 0.0, %v403
    %405 = vmatmul.bf16.gmra.mxu0 %v377
    %v406 = vpop.f32.mrf.mxu0
    %v407 = vadd.f32 0.0, %v406
    %v408 = vpop.f32.mrf.mxu0
    %v409 = vadd.f32 0.0, %v408
    %410 = vmatmul.bf16.gmra.mxu0 %v378
    %v411 = vpop.f32.mrf.mxu0
    %v412 = vadd.f32 0.0, %v411
    %v413 = vpop.f32.mrf.mxu0
    %v414 = vadd.f32 0.0, %v413
    %415 = vmatmul.bf16.gmra.mxu0 %v379
    %v416 = vpop.f32.mrf.mxu0
    %v417 = vadd.f32 0.0, %v416
    %v418 = vpop.f32.mrf.mxu0
    %v419 = vadd.f32 0.0, %v418
    %420 = vmatmul.bf16.gmra.mxu0 %v380
    %v421 = vpop.f32.mrf.mxu0
    %v422 = vadd.f32 0.0, %v421
    %v423 = vpop.f32.mrf.mxu0
    %v424 = vadd.f32 0.0, %v423
    %425 = vmatmul.bf16.gmra.mxu0 %v381
    %v426 = vpop.f32.mrf.mxu0
    %v427 = vadd.f32 0.0, %v426
    %v428 = vpop.f32.mrf.mxu0
    %v429 = vadd.f32 0.0, %v428
    %430 = vdwg.mxu0
    %v431 = vld [vmem:[%s1] sm:$0xff]
    %v432 = vld [vmem:[%s1 + $0x8] sm:$0xff]
    %v433 = vld [vmem:[%s1 + $0x10] sm:$0xff]
    %v434 = vld [vmem:[%s1 + $0x18] sm:$0xff]
    %v435 = vld [vmem:[%s1 + $0x20] sm:$0xff]
    %v436 = vld [vmem:[%s1 + $0x28] sm:$0xff]
    %v437 = vld [vmem:[%s1 + $0x30] sm:$0xff]
    %v438 = vld [vmem:[%s1 + $0x38] sm:$0xff]
    %v439 = vld [vmem:[%s1 + $0x40] sm:$0xff]
    %v440 = vld [vmem:[%s1 + $0x48] sm:$0xff]
    %v441 = vld [vmem:[%s1 + $0x50] sm:$0xff]
    %v442 = vld [vmem:[%s1 + $0x58] sm:$0xff]
    %v443 = vld [vmem:[%s1 + $0x60] sm:$0xff]
    %v444 = vld [vmem:[%s1 + $0x68] sm:$0xff]
    %v445 = vld [vmem:[%s1 + $0x70] sm:$0xff]
    %v446 = vld [vmem:[%s1 + $0x78] sm:$0xff]
    %448 = vset.pattern.permute.xlu0 0
    %449 = vperm.xlu0 %448, %v431
    %v450 = vpop.permute.xlu0 %449
    %453 = vset.pattern.permute.xlu0 0
    %454 = vperm.xlu0 %453, %v432
    %v455 = vpop.permute.xlu0 %454
    %458 = vset.pattern.permute.xlu0 0
    %459 = vperm.xlu0 %458, %v433
    %v460 = vpop.permute.xlu0 %459
    %463 = vset.pattern.permute.xlu0 0
    %464 = vperm.xlu0 %463, %v434
    %v465 = vpop.permute.xlu0 %464
    %468 = vset.pattern.permute.xlu0 0
    %469 = vperm.xlu0 %468, %v435
    %v470 = vpop.permute.xlu0 %469
    %473 = vset.pattern.permute.xlu0 0
    %474 = vperm.xlu0 %473, %v436
    %v475 = vpop.permute.xlu0 %474
    %478 = vset.pattern.permute.xlu0 0
    %479 = vperm.xlu0 %478, %v437
    %v480 = vpop.permute.xlu0 %479
    %483 = vset.pattern.permute.xlu0 0
    %484 = vperm.xlu0 %483, %v438
    %v485 = vpop.permute.xlu0 %484
    %488 = vset.pattern.permute.xlu0 0
    %489 = vperm.xlu0 %488, %v439
    %v490 = vpop.permute.xlu0 %489
    %493 = vset.pattern.permute.xlu0 0
    %494 = vperm.xlu0 %493, %v440
    %v495 = vpop.permute.xlu0 %494
    %498 = vset.pattern.permute.xlu0 0
    %499 = vperm.xlu0 %498, %v441
    %v500 = vpop.permute.xlu0 %499
    %503 = vset.pattern.permute.xlu0 0
    %504 = vperm.xlu0 %503, %v442
    %v505 = vpop.permute.xlu0 %504
    %508 = vset.pattern.permute.xlu0 0
    %509 = vperm.xlu0 %508, %v443
    %v510 = vpop.permute.xlu0 %509
    %513 = vset.pattern.permute.xlu0 0
    %514 = vperm.xlu0 %513, %v444
    %v515 = vpop.permute.xlu0 %514
    %518 = vset.pattern.permute.xlu0 0
    %519 = vperm.xlu0 %518, %v445
    %v520 = vpop.permute.xlu0 %519
    %523 = vset.pattern.permute.xlu0 0
    %524 = vperm.xlu0 %523, %v446
    %v525 = vpop.permute.xlu0 %524
    %v527 = vmul.f32 %v392, %v450
    %v528 = vmul.f32 %v394, %v455
    %v529 = vmul.f32 %v397, %v460
    %v530 = vmul.f32 %v399, %v465
    %v531 = vmul.f32 %v402, %v470
    %v532 = vmul.f32 %v404, %v475
    %v533 = vmul.f32 %v407, %v480
    %v534 = vmul.f32 %v409, %v485
    %v535 = vmul.f32 %v412, %v490
    %v536 = vmul.f32 %v414, %v495
    %v537 = vmul.f32 %v417, %v500
    %v538 = vmul.f32 %v419, %v505
    %v539 = vmul.f32 %v422, %v510
    %v540 = vmul.f32 %v424, %v515
    %v541 = vmul.f32 %v427, %v520
    %v542 = vmul.f32 %v429, %v525
    %v543 = vadd.f32 %v314, %v527
    %v544 = vadd.f32 %v315, %v528
    %v545 = vadd.f32 %v316, %v529
    %v546 = vadd.f32 %v317, %v530
    %v547 = vadd.f32 %v318, %v531
    %v548 = vadd.f32 %v319, %v532
    %v549 = vadd.f32 %v320, %v533
    %v550 = vadd.f32 %v321, %v534
    %v551 = vadd.f32 %v322, %v535
    %v552 = vadd.f32 %v323, %v536
    %v553 = vadd.f32 %v324, %v537
    %v554 = vadd.f32 %v325, %v538
    %v555 = vadd.f32 %v326, %v539
    %v556 = vadd.f32 %v327, %v540
    %v557 = vadd.f32 %v328, %v541
    %v558 = vadd.f32 %v329, %v542
    %v559 = vmul.f32 %v543, %v543
    %v560 = vmul.f32 %v544, %v544
    %v561 = vmul.f32 %v545, %v545
    %v562 = vmul.f32 %v546, %v546
    %v563 = vmul.f32 %v547, %v547
    %v564 = vmul.f32 %v548, %v548
    %v565 = vmul.f32 %v549, %v549
    %v566 = vmul.f32 %v550, %v550
    %v567 = vmul.f32 %v551, %v551
    %v568 = vmul.f32 %v552, %v552
    %v569 = vmul.f32 %v553, %v553
    %v570 = vmul.f32 %v554, %v554
    %v571 = vmul.f32 %v555, %v555
    %v572 = vmul.f32 %v556, %v556
    %v573 = vmul.f32 %v557, %v557
    %v574 = vmul.f32 %v558, %v558
    %575 = vadd.xlane.f32.xlu0 %v559
    %v576 = vpop.xlane.xlu0 %575
    %577 = vadd.xlane.f32.xlu0 %v560
    %v578 = vpop.xlane.xlu0 %577
    %579 = vadd.xlane.f32.xlu0 %v561
    %v580 = vpop.xlane.xlu0 %579
    %581 = vadd.xlane.f32.xlu0 %v562
    %v582 = vpop.xlane.xlu0 %581
    %583 = vadd.xlane.f32.xlu0 %v563
    %v584 = vpop.xlane.xlu0 %583
    %585 = vadd.xlane.f32.xlu0 %v564
    %v586 = vpop.xlane.xlu0 %585
    %587 = vadd.xlane.f32.xlu0 %v565
    %v588 = vpop.xlane.xlu0 %587
    %589 = vadd.xlane.f32.xlu0 %v566
    %v590 = vpop.xlane.xlu0 %589
    %591 = vadd.xlane.f32.xlu0 %v567
    %v592 = vpop.xlane.xlu0 %591
    %593 = vadd.xlane.f32.xlu0 %v568
    %v594 = vpop.xlane.xlu0 %593
    %595 = vadd.xlane.f32.xlu0 %v569
    %v596 = vpop.xlane.xlu0 %595
    %597 = vadd.xlane.f32.xlu0 %v570
    %v598 = vpop.xlane.xlu0 %597
    %599 = vadd.xlane.f32.xlu0 %v571
    %v600 = vpop.xlane.xlu0 %599
    %601 = vadd.xlane.f32.xlu0 %v572
    %v602 = vpop.xlane.xlu0 %601
    %603 = vadd.xlane.f32.xlu0 %v573
    %v604 = vpop.xlane.xlu0 %603
    %605 = vadd.xlane.f32.xlu0 %v574
    %v606 = vpop.xlane.xlu0 %605
    %v607 = vmax.f32 %v576, 1e-24
    %v608 = vmax.f32 %v578, 1e-24
    %v609 = vmax.f32 %v580, 1e-24
    %v610 = vmax.f32 %v582, 1e-24
    %v611 = vmax.f32 %v584, 1e-24
    %v612 = vmax.f32 %v586, 1e-24
    %v613 = vmax.f32 %v588, 1e-24
    %v614 = vmax.f32 %v590, 1e-24
    %v615 = vmax.f32 %v592, 1e-24
    %v616 = vmax.f32 %v594, 1e-24
    %v617 = vmax.f32 %v596, 1e-24
    %v618 = vmax.f32 %v598, 1e-24
    %v619 = vmax.f32 %v600, 1e-24
    %v620 = vmax.f32 %v602, 1e-24
    %v621 = vmax.f32 %v604, 1e-24
    %v622 = vmax.f32 %v606, 1e-24
    %v623 = vrsqrt.pop %v607
    %v624 = vmul.f32 %v623, %v607
    %v625 = vmul.f32 %v624, %v623
    %v626 = vmul.f32 0.5, %v625
    %v627 = vsub.f32 1.5, %v626
    %v628 = vmul.f32 %v623, %v627
    %vm629 = vweird.f32 %v607
    %vm630 = vweird.f32 %v623
    %vm631 = vmor %vm629, %vm630
    %v632 = vsel %vm631, %v623, %v628
    %v633 = vrsqrt.pop %v608
    %v634 = vmul.f32 %v633, %v608
    %v635 = vmul.f32 %v634, %v633
    %v636 = vmul.f32 0.5, %v635
    %v637 = vsub.f32 1.5, %v636
    %v638 = vmul.f32 %v633, %v637
    %vm639 = vweird.f32 %v608
    %vm640 = vweird.f32 %v633
    %vm641 = vmor %vm639, %vm640
    %v642 = vsel %vm641, %v633, %v638
    %v643 = vrsqrt.pop %v609
    %v644 = vmul.f32 %v643, %v609
    %v645 = vmul.f32 %v644, %v643
    %v646 = vmul.f32 0.5, %v645
    %v647 = vsub.f32 1.5, %v646
    %v648 = vmul.f32 %v643, %v647
    %vm649 = vweird.f32 %v609
    %vm650 = vweird.f32 %v643
    %vm651 = vmor %vm649, %vm650
    %v652 = vsel %vm651, %v643, %v648
    %v653 = vrsqrt.pop %v610
    %v654 = vmul.f32 %v653, %v610
    %v655 = vmul.f32 %v654, %v653
    %v656 = vmul.f32 0.5, %v655
    %v657 = vsub.f32 1.5, %v656
    %v658 = vmul.f32 %v653, %v657
    %vm659 = vweird.f32 %v610
    %vm660 = vweird.f32 %v653
    %vm661 = vmor %vm659, %vm660
    %v662 = vsel %vm661, %v653, %v658
    %v663 = vrsqrt.pop %v611
    %v664 = vmul.f32 %v663, %v611
    %v665 = vmul.f32 %v664, %v663
    %v666 = vmul.f32 0.5, %v665
    %v667 = vsub.f32 1.5, %v666
    %v668 = vmul.f32 %v663, %v667
    %vm669 = vweird.f32 %v611
    %vm670 = vweird.f32 %v663
    %vm671 = vmor %vm669, %vm670
    %v672 = vsel %vm671, %v663, %v668
    %v673 = vrsqrt.pop %v612
    %v674 = vmul.f32 %v673, %v612
    %v675 = vmul.f32 %v674, %v673
    %v676 = vmul.f32 0.5, %v675
    %v677 = vsub.f32 1.5, %v676
    %v678 = vmul.f32 %v673, %v677
    %vm679 = vweird.f32 %v612
    %vm680 = vweird.f32 %v673
    %vm681 = vmor %vm679, %vm680
    %v682 = vsel %vm681, %v673, %v678
    %v683 = vrsqrt.pop %v613
    %v684 = vmul.f32 %v683, %v613
    %v685 = vmul.f32 %v684, %v683
    %v686 = vmul.f32 0.5, %v685
    %v687 = vsub.f32 1.5, %v686
    %v688 = vmul.f32 %v683, %v687
    %vm689 = vweird.f32 %v613
    %vm690 = vweird.f32 %v683
    %vm691 = vmor %vm689, %vm690
    %v692 = vsel %vm691, %v683, %v688
    %v693 = vrsqrt.pop %v614
    %v694 = vmul.f32 %v693, %v614
    %v695 = vmul.f32 %v694, %v693
    %v696 = vmul.f32 0.5, %v695
    %v697 = vsub.f32 1.5, %v696
    %v698 = vmul.f32 %v693, %v697
    %vm699 = vweird.f32 %v614
    %vm700 = vweird.f32 %v693
    %vm701 = vmor %vm699, %vm700
    %v702 = vsel %vm701, %v693, %v698
    %v703 = vrsqrt.pop %v615
    %v704 = vmul.f32 %v703, %v615
    %v705 = vmul.f32 %v704, %v703
    %v706 = vmul.f32 0.5, %v705
    %v707 = vsub.f32 1.5, %v706
    %v708 = vmul.f32 %v703, %v707
    %vm709 = vweird.f32 %v615
    %vm710 = vweird.f32 %v703
    %vm711 = vmor %vm709, %vm710
    %v712 = vsel %vm711, %v703, %v708
    %v713 = vrsqrt.pop %v616
    %v714 = vmul.f32 %v713, %v616
    %v715 = vmul.f32 %v714, %v713
    %v716 = vmul.f32 0.5, %v715
    %v717 = vsub.f32 1.5, %v716
    %v718 = vmul.f32 %v713, %v717
    %vm719 = vweird.f32 %v616
    %vm720 = vweird.f32 %v713
    %vm721 = vmor %vm719, %vm720
    %v722 = vsel %vm721, %v713, %v718
    %v723 = vrsqrt.pop %v617
    %v724 = vmul.f32 %v723, %v617
    %v725 = vmul.f32 %v724, %v723
    %v726 = vmul.f32 0.5, %v725
    %v727 = vsub.f32 1.5, %v726
    %v728 = vmul.f32 %v723, %v727
    %vm729 = vweird.f32 %v617
    %vm730 = vweird.f32 %v723
    %vm731 = vmor %vm729, %vm730
    %v732 = vsel %vm731, %v723, %v728
    %v733 = vrsqrt.pop %v618
    %v734 = vmul.f32 %v733, %v618
    %v735 = vmul.f32 %v734, %v733
    %v736 = vmul.f32 0.5, %v735
    %v737 = vsub.f32 1.5, %v736
    %v738 = vmul.f32 %v733, %v737
    %vm739 = vweird.f32 %v618
    %vm740 = vweird.f32 %v733
    %vm741 = vmor %vm739, %vm740
    %v742 = vsel %vm741, %v733, %v738
    %v743 = vrsqrt.pop %v619
    %v744 = vmul.f32 %v743, %v619
    %v745 = vmul.f32 %v744, %v743
    %v746 = vmul.f32 0.5, %v745
    %v747 = vsub.f32 1.5, %v746
    %v748 = vmul.f32 %v743, %v747
    %vm749 = vweird.f32 %v619
    %vm750 = vweird.f32 %v743
    %vm751 = vmor %vm749, %vm750
    %v752 = vsel %vm751, %v743, %v748
    %v753 = vrsqrt.pop %v620
    %v754 = vmul.f32 %v753, %v620
    %v755 = vmul.f32 %v754, %v753
    %v756 = vmul.f32 0.5, %v755
    %v757 = vsub.f32 1.5, %v756
    %v758 = vmul.f32 %v753, %v757
    %vm759 = vweird.f32 %v620
    %vm760 = vweird.f32 %v753
    %vm761 = vmor %vm759, %vm760
    %v762 = vsel %vm761, %v753, %v758
    %v763 = vrsqrt.pop %v621
    %v764 = vmul.f32 %v763, %v621
    %v765 = vmul.f32 %v764, %v763
    %v766 = vmul.f32 0.5, %v765
    %v767 = vsub.f32 1.5, %v766
    %v768 = vmul.f32 %v763, %v767
    %vm769 = vweird.f32 %v621
    %vm770 = vweird.f32 %v763
    %vm771 = vmor %vm769, %vm770
    %v772 = vsel %vm771, %v763, %v768
    %v773 = vrsqrt.pop %v622
    %v774 = vmul.f32 %v773, %v622
    %v775 = vmul.f32 %v774, %v773
    %v776 = vmul.f32 0.5, %v775
    %v777 = vsub.f32 1.5, %v776
    %v778 = vmul.f32 %v773, %v777
    %vm779 = vweird.f32 %v622
    %vm780 = vweird.f32 %v773
    %vm781 = vmor %vm779, %vm780
    %v782 = vsel %vm781, %v773, %v778
    %v783 = vmul.f32 %v543, %v632
    %v784 = vmul.f32 %v544, %v642
    %v785 = vmul.f32 %v545, %v652
    %v786 = vmul.f32 %v546, %v662
    %v787 = vmul.f32 %v547, %v672
    %v788 = vmul.f32 %v548, %v682
    %v789 = vmul.f32 %v549, %v692
    %v790 = vmul.f32 %v550, %v702
    %v791 = vmul.f32 %v551, %v712
    %v792 = vmul.f32 %v552, %v722
    %v793 = vmul.f32 %v553, %v732
    %v794 = vmul.f32 %v554, %v742
    %v795 = vmul.f32 %v555, %v752
    %v796 = vmul.f32 %v556, %v762
    %v797 = vmul.f32 %v557, %v772
    %v798 = vmul.f32 %v558, %v782
    %v799 = vmax.f32 %v783, 0.0
    %v800 = vmax.f32 %v784, 0.0
    %v801 = vmax.f32 %v785, 0.0
    %v802 = vmax.f32 %v786, 0.0
    %v803 = vmax.f32 %v787, 0.0
    %v804 = vmax.f32 %v788, 0.0
    %v805 = vmax.f32 %v789, 0.0
    %v806 = vmax.f32 %v790, 0.0
    %v807 = vmax.f32 %v791, 0.0
    %v808 = vmax.f32 %v792, 0.0
    %v809 = vmax.f32 %v793, 0.0
    %v810 = vmax.f32 %v794, 0.0
    %v811 = vmax.f32 %v795, 0.0
    %v812 = vmax.f32 %v796, 0.0
    %v813 = vmax.f32 %v797, 0.0
    %v814 = vmax.f32 %v798, 0.0
    %v815 = vpack.c.bf16 %v799, %v799
    %v816 = vpack.c.bf16 %v800, %v800
    %v817 = vpack.c.bf16 %v801, %v801
    %v818 = vpack.c.bf16 %v802, %v802
    %v819 = vpack.c.bf16 %v803, %v803
    %v820 = vpack.c.bf16 %v804, %v804
    %v821 = vpack.c.bf16 %v805, %v805
    %v822 = vpack.c.bf16 %v806, %v806
    %v823 = vpack.c.bf16 %v807, %v807
    %v824 = vpack.c.bf16 %v808, %v808
    %v825 = vpack.c.bf16 %v809, %v809
    %v826 = vpack.c.bf16 %v810, %v810
    %v827 = vpack.c.bf16 %v811, %v811
    %v828 = vpack.c.bf16 %v812, %v812
    %v829 = vpack.c.bf16 %v813, %v813
    %v830 = vpack.c.bf16 %v814, %v814
    %831 = vst [vmem:[%s5] sm:$0xf] %v815
    %832 = vst [vmem:[%s5 + $0x4] sm:$0xf] %v816
    %833 = vst [vmem:[%s5 + $0x8] sm:$0xf] %v817
    %834 = vst [vmem:[%s5 + $0xc] sm:$0xf] %v818
    %835 = vst [vmem:[%s5 + $0x10] sm:$0xf] %v819
    %836 = vst [vmem:[%s5 + $0x14] sm:$0xf] %v820
    %837 = vst [vmem:[%s5 + $0x18] sm:$0xf] %v821
    %838 = vst [vmem:[%s5 + $0x1c] sm:$0xf] %v822
    %839 = vst [vmem:[%s5 + $0x20] sm:$0xf] %v823
    %840 = vst [vmem:[%s5 + $0x24] sm:$0xf] %v824
    %841 = vst [vmem:[%s5 + $0x28] sm:$0xf] %v825
    %842 = vst [vmem:[%s5 + $0x2c] sm:$0xf] %v826
    %843 = vst [vmem:[%s5 + $0x30] sm:$0xf] %v827
    %844 = vst [vmem:[%s5 + $0x34] sm:$0xf] %v828
    %845 = vst [vmem:[%s5 + $0x38] sm:$0xf] %v829
    %846 = vst [vmem:[%s5 + $0x3c] sm:$0xf] %v830
    // Predicated region
    $region30: #{graphsage_forward.4} parent=1 // pred_check
      _
    $region31: #{graphsage_forward.4} parent=1 // pred_check_branch
      %848 = sbr.rel (0) target = $region33
    $region32: #{graphsage_forward.4} parent=1 // pred_region
      _
    $region33: #{graphsage_forward.4} parent=1 // pred_fallthru
      _
    // Predicated region
    $region34: #{graphsage_forward.4} parent=1 // pred_check
      _
    $region35: #{graphsage_forward.4} parent=1 // pred_check_branch
      %850 = sbr.rel (0) target = $region37
    $region36: #{graphsage_forward.4} parent=1 // pred_region
      _
    $region37: #{graphsage_forward.4} parent=1 // pred_fallthru
      _
    %851 = vsyncpa [#allocation3], 1
    %852 = vsyncpa [#allocation5], 1

// kernel: graphsage_forward.5
$region0: #{graphsage_forward.5}
  #allocation0 [shape = 'u32[]', space=smem, size = 0x4, offset = 0x4, fixed_abs, tag = 'smem constant byte address 0x4 - core index']
  #allocation1 [shape = 'u32[72,128]{1,0:T(1,128)}', space=vmem, size = 0x9000, scoped, tag = 'internal scratch']
  %s0 = inlined_call_operand.hbm [shape: s8[128,128], index: 0, kind: input, shape index: {}]
  %s1 = inlined_call_operand.vmem [shape: f32[128,1], index: 1, kind: input, shape index: {}]
  %s2 = inlined_call_operand.vmem [shape: bf16[128,128], index: 2, kind: input, shape index: {}]
  %s3 = inlined_call_operand.hbm [shape: bf16[128,256], index: 3, kind: input, shape index: {}]
  %s4 = inlined_call_operand.vmem [shape: f32[1,128], index: 4, kind: input, shape index: {}]
  %s5 = inlined_call_operand.hbm [shape: f32[128,128], index: 5, kind: output, shape index: {}]
  %s6 = sld [smem:[#allocation0]]
  $region38: #{graphsage_forward.5} parent=0
    _
  %s8 = ssub.s32 1, %s6
  %s9 = scalar_select 0, %s8, %s6
  $region1: #{graphsage_forward.5} parent=0
    #allocation2 [shape = 'u8[16384]{0}', space=vmem, size = 0x4000, scoped, tag = 'input window, operand 0, single buffered']
    #allocation3 [shape = 's32[1]{0}', space=sflag, size = 0x4, scoped, tag = 'scoped memory for graphsage_forward.5']
    #allocation4 [shape = 's32[1]{0}', space=sflag, size = 0x4, scoped, tag = 'scoped memory for graphsage_forward.5']
    #allocation5 [shape = 'u8[65536]{0}', space=vmem, size = 0x10000, scoped, tag = 'input window, operand 3, single buffered']
    #allocation6 [shape = 's32[1]{0}', space=sflag, size = 0x4, scoped, tag = 'scoped memory for graphsage_forward.5']
    #allocation7 [shape = 'u8[65536]{0}', space=vmem, size = 0x10000, scoped, tag = 'output window, operand 0, single buffered']
    %10 = vsyncpa [#allocation3], 0
    %11 = vsyncpa [#allocation6], 0
    %12 = vsyncpa [#allocation4], 0
    // Predicated region
    $region2: #{graphsage_forward.5} parent=1 // pred_check
      _
    $region3: #{graphsage_forward.5} parent=1 // pred_check_branch
      %14 = sbr.rel (0) target = $region5
    $region4: #{graphsage_forward.5} parent=1 // pred_region
      %16 = vsyncadd [#allocation3], 0
      %s17 = sshll.u32 %s0, 4
      %s18 = int_to_ptr.hbm [resolvable:$true] %s17
      %s19 = sshll.u32 [#allocation2], 4
      %s20 = int_to_ptr.vmem [resolvable:$true] %s19
      %25 = dma.hbm_to_vmem [thread:$0]  %s18, 512, %s20, [#allocation3], 128, 128, 8
    $region5: #{graphsage_forward.5} parent=1 // pred_fallthru
      _
    // Predicated region
    $region6: #{graphsage_forward.5} parent=1 // pred_check
      _
    $region7: #{graphsage_forward.5} parent=1 // pred_check_branch
      %27 = sbr.rel (0) target = $region9
    $region8: #{graphsage_forward.5} parent=1 // pred_region
      _
    $region9: #{graphsage_forward.5} parent=1 // pred_fallthru
      _
    // Predicated region
    $region10: #{graphsage_forward.5} parent=1 // pred_check
      _
    $region11: #{graphsage_forward.5} parent=1 // pred_check_branch
      %29 = sbr.rel (0) target = $region13
    $region12: #{graphsage_forward.5} parent=1 // pred_region
      _
    $region13: #{graphsage_forward.5} parent=1 // pred_fallthru
      _
    // Predicated region
    $region14: #{graphsage_forward.5} parent=1 // pred_check
      _
    $region15: #{graphsage_forward.5} parent=1 // pred_check_branch
      %31 = sbr.rel (0) target = $region17
    $region16: #{graphsage_forward.5} parent=1 // pred_region
      %33 = vsyncadd [#allocation6], 0
      %s34 = sshll.u32 %s3, 4
      %s35 = int_to_ptr.hbm [resolvable:$true] %s34
      %s36 = sshll.u32 [#allocation5], 4
      %s37 = int_to_ptr.vmem [resolvable:$true] %s36
      %42 = dma.hbm_to_vmem [thread:$0]  %s35, 2048, %s37, [#allocation6], 128, 128, 8
    $region17: #{graphsage_forward.5} parent=1 // pred_fallthru
      _
    // Predicated region
    $region18: #{graphsage_forward.5} parent=1 // pred_check
      _
    $region19: #{graphsage_forward.5} parent=1 // pred_check_branch
      %44 = sbr.rel (0) target = $region21
    $region20: #{graphsage_forward.5} parent=1 // pred_region
      _
    $region21: #{graphsage_forward.5} parent=1 // pred_fallthru
      _
    // Predicated region
    $region22: #{graphsage_forward.5} parent=1 // pred_check
      _
    $region23: #{graphsage_forward.5} parent=1 // pred_check_branch
      %46 = sbr.rel (0) target = $region25
    $region24: #{graphsage_forward.5} parent=1 // pred_region
      %48 = dma.done [#allocation3], 512
    $region25: #{graphsage_forward.5} parent=1 // pred_fallthru
      _
    // Predicated region
    $region26: #{graphsage_forward.5} parent=1 // pred_check
      _
    $region27: #{graphsage_forward.5} parent=1 // pred_check_branch
      %50 = sbr.rel (0) target = $region29
    $region28: #{graphsage_forward.5} parent=1 // pred_region
      %52 = dma.done [#allocation6], 2048
    $region29: #{graphsage_forward.5} parent=1 // pred_fallthru
      _
    %v53 = vld [vmem:[%s2] sm:$0xf]
    %v54 = vld [vmem:[%s2 + $0x4] sm:$0xf]
    %v55 = vld [vmem:[%s2 + $0x8] sm:$0xf]
    %v56 = vld [vmem:[%s2 + $0xc] sm:$0xf]
    %v57 = vld [vmem:[%s2 + $0x10] sm:$0xf]
    %v58 = vld [vmem:[%s2 + $0x14] sm:$0xf]
    %v59 = vld [vmem:[%s2 + $0x18] sm:$0xf]
    %v60 = vld [vmem:[%s2 + $0x1c] sm:$0xf]
    %v61 = vld [vmem:[%s2 + $0x20] sm:$0xf]
    %v62 = vld [vmem:[%s2 + $0x24] sm:$0xf]
    %v63 = vld [vmem:[%s2 + $0x28] sm:$0xf]
    %v64 = vld [vmem:[%s2 + $0x2c] sm:$0xf]
    %v65 = vld [vmem:[%s2 + $0x30] sm:$0xf]
    %v66 = vld [vmem:[%s2 + $0x34] sm:$0xf]
    %v67 = vld [vmem:[%s2 + $0x38] sm:$0xf]
    %v68 = vld [vmem:[%s2 + $0x3c] sm:$0xf]
    %v69 = vld [vmem:[#allocation5] sm:$0xff]
    %v70 = vld [vmem:[#allocation5 + $0x8] sm:$0xff]
    %v71 = vld [vmem:[#allocation5 + $0x10] sm:$0xff]
    %v72 = vld [vmem:[#allocation5 + $0x18] sm:$0xff]
    %v73 = vld [vmem:[#allocation5 + $0x20] sm:$0xff]
    %v74 = vld [vmem:[#allocation5 + $0x28] sm:$0xff]
    %v75 = vld [vmem:[#allocation5 + $0x30] sm:$0xff]
    %v76 = vld [vmem:[#allocation5 + $0x38] sm:$0xff]
    %v77 = vld [vmem:[#allocation5 + $0x40] sm:$0xff]
    %v78 = vld [vmem:[#allocation5 + $0x48] sm:$0xff]
    %v79 = vld [vmem:[#allocation5 + $0x50] sm:$0xff]
    %v80 = vld [vmem:[#allocation5 + $0x58] sm:$0xff]
    %v81 = vld [vmem:[#allocation5 + $0x60] sm:$0xff]
    %v82 = vld [vmem:[#allocation5 + $0x68] sm:$0xff]
    %v83 = vld [vmem:[#allocation5 + $0x70] sm:$0xff]
    %v84 = vld [vmem:[#allocation5 + $0x78] sm:$0xff]
    %v101 = vunpack.c.l.b16 %v53
    %v102 = vunpack.c.l.b16 %v54
    %v103 = vunpack.c.l.b16 %v55
    %v104 = vunpack.c.l.b16 %v56
    %v105 = vunpack.c.l.b16 %v57
    %v106 = vunpack.c.l.b16 %v58
    %v107 = vunpack.c.l.b16 %v59
    %v108 = vunpack.c.l.b16 %v60
    %v109 = vunpack.c.l.b16 %v61
    %v110 = vunpack.c.l.b16 %v62
    %v111 = vunpack.c.l.b16 %v63
    %v112 = vunpack.c.l.b16 %v64
    %v113 = vunpack.c.l.b16 %v65
    %v114 = vunpack.c.l.b16 %v66
    %v115 = vunpack.c.l.b16 %v67
    %v116 = vunpack.c.l.b16 %v68
    %v117 = vpack.c.b16 %v102, %v101
    %v118 = vpack.c.b16 %v104, %v103
    %v119 = vpack.c.b16 %v106, %v105
    %v120 = vpack.c.b16 %v108, %v107
    %v121 = vpack.c.b16 %v110, %v109
    %v122 = vpack.c.b16 %v112, %v111
    %v123 = vpack.c.b16 %v114, %v113
    %v124 = vpack.c.b16 %v116, %v115
    %v149 = vunpack.c.l.b16 %v69
    %v150 = vunpack.c.h.b16 %v69
    %v151 = vunpack.c.l.b16 %v70
    %v152 = vunpack.c.h.b16 %v70
    %v153 = vunpack.c.l.b16 %v71
    %v154 = vunpack.c.h.b16 %v71
    %v155 = vunpack.c.l.b16 %v72
    %v156 = vunpack.c.h.b16 %v72
    %v157 = vunpack.c.l.b16 %v73
    %v158 = vunpack.c.h.b16 %v73
    %v159 = vunpack.c.l.b16 %v74
    %v160 = vunpack.c.h.b16 %v74
    %v161 = vunpack.c.l.b16 %v75
    %v162 = vunpack.c.h.b16 %v75
    %v163 = vunpack.c.l.b16 %v76
    %v164 = vunpack.c.h.b16 %v76
    %v165 = vunpack.c.l.b16 %v77
    %v166 = vunpack.c.h.b16 %v77
    %v167 = vunpack.c.l.b16 %v78
    %v168 = vunpack.c.h.b16 %v78
    %v169 = vunpack.c.l.b16 %v79
    %v170 = vunpack.c.h.b16 %v79
    %v171 = vunpack.c.l.b16 %v80
    %v172 = vunpack.c.h.b16 %v80
    %v173 = vunpack.c.l.b16 %v81
    %v174 = vunpack.c.h.b16 %v81
    %v175 = vunpack.c.l.b16 %v82
    %v176 = vunpack.c.h.b16 %v82
    %v177 = vunpack.c.l.b16 %v83
    %v178 = vunpack.c.h.b16 %v83
    %v179 = vunpack.c.l.b16 %v84
    %v180 = vunpack.c.h.b16 %v84
    %v181 = vpack.c.b16 %v151, %v149
    %v182 = vpack.c.b16 %v152, %v150
    %v183 = vpack.c.b16 %v155, %v153
    %v184 = vpack.c.b16 %v156, %v154
    %v185 = vpack.c.b16 %v159, %v157
    %v186 = vpack.c.b16 %v160, %v158
    %v187 = vpack.c.b16 %v163, %v161
    %v188 = vpack.c.b16 %v164, %v162
    %v189 = vpack.c.b16 %v167, %v165
    %v190 = vpack.c.b16 %v168, %v166
    %v191 = vpack.c.b16 %v171, %v169
    %v192 = vpack.c.b16 %v172, %v170
    %v193 = vpack.c.b16 %v175, %v173
    %v194 = vpack.c.b16 %v176, %v174
    %v195 = vpack.c.b16 %v179, %v177
    %v196 = vpack.c.b16 %v180, %v178
    %213 = vmatpush.bf16.msra.mxu0 %v195
    %214 = vmatpush.bf16.msra.mxu0 %v193
    %215 = vmatpush.bf16.msra.mxu0 %v191
    %216 = vmatpush.bf16.msra.mxu0 %v189
    %217 = vmatpush.bf16.msra.mxu0 %v187
    %218 = vmatpush.bf16.msra.mxu0 %v185
    %219 = vmatpush.bf16.msra.mxu0 %v183
    %220 = vmatpush.bf16.msra.mxu0 %v181
    %221 = vmatmul.bf16.gmra.mxu0 %v117
    %v222 = vpop.f32.mrf.mxu0
    %v223 = vadd.f32 0.0, %v222
    %v224 = vpop.f32.mrf.mxu0
    %v225 = vadd.f32 0.0, %v224
    %226 = vmatmul.bf16.gmra.mxu0 %v118
    %v227 = vpop.f32.mrf.mxu0
    %v228 = vadd.f32 0.0, %v227
    %v229 = vpop.f32.mrf.mxu0
    %v230 = vadd.f32 0.0, %v229
    %231 = vmatmul.bf16.gmra.mxu0 %v119
    %v232 = vpop.f32.mrf.mxu0
    %v233 = vadd.f32 0.0, %v232
    %v234 = vpop.f32.mrf.mxu0
    %v235 = vadd.f32 0.0, %v234
    %236 = vmatmul.bf16.gmra.mxu0 %v120
    %v237 = vpop.f32.mrf.mxu0
    %v238 = vadd.f32 0.0, %v237
    %v239 = vpop.f32.mrf.mxu0
    %v240 = vadd.f32 0.0, %v239
    %241 = vmatmul.bf16.gmra.mxu0 %v121
    %v242 = vpop.f32.mrf.mxu0
    %v243 = vadd.f32 0.0, %v242
    %v244 = vpop.f32.mrf.mxu0
    %v245 = vadd.f32 0.0, %v244
    %246 = vmatmul.bf16.gmra.mxu0 %v122
    %v247 = vpop.f32.mrf.mxu0
    %v248 = vadd.f32 0.0, %v247
    %v249 = vpop.f32.mrf.mxu0
    %v250 = vadd.f32 0.0, %v249
    %251 = vmatmul.bf16.gmra.mxu0 %v123
    %v252 = vpop.f32.mrf.mxu0
    %v253 = vadd.f32 0.0, %v252
    %v254 = vpop.f32.mrf.mxu0
    %v255 = vadd.f32 0.0, %v254
    %256 = vmatmul.bf16.gmra.mxu0 %v124
    %v257 = vpop.f32.mrf.mxu0
    %v258 = vadd.f32 0.0, %v257
    %v259 = vpop.f32.mrf.mxu0
    %v260 = vadd.f32 0.0, %v259
    %261 = vdwg.mxu0
    %262 = vmatpush.bf16.msra.mxu0 %v196
    %263 = vmatpush.bf16.msra.mxu0 %v194
    %264 = vmatpush.bf16.msra.mxu0 %v192
    %265 = vmatpush.bf16.msra.mxu0 %v190
    %266 = vmatpush.bf16.msra.mxu0 %v188
    %267 = vmatpush.bf16.msra.mxu0 %v186
    %268 = vmatpush.bf16.msra.mxu0 %v184
    %269 = vmatpush.bf16.msra.mxu0 %v182
    %270 = vmatmul.bf16.gmra.mxu0 %v117
    %v271 = vpop.f32.mrf.mxu0
    %v272 = vadd.f32 0.0, %v271
    %v273 = vpop.f32.mrf.mxu0
    %v274 = vadd.f32 0.0, %v273
    %275 = vmatmul.bf16.gmra.mxu0 %v118
    %v276 = vpop.f32.mrf.mxu0
    %v277 = vadd.f32 0.0, %v276
    %v278 = vpop.f32.mrf.mxu0
    %v279 = vadd.f32 0.0, %v278
    %280 = vmatmul.bf16.gmra.mxu0 %v119
    %v281 = vpop.f32.mrf.mxu0
    %v282 = vadd.f32 0.0, %v281
    %v283 = vpop.f32.mrf.mxu0
    %v284 = vadd.f32 0.0, %v283
    %285 = vmatmul.bf16.gmra.mxu0 %v120
    %v286 = vpop.f32.mrf.mxu0
    %v287 = vadd.f32 0.0, %v286
    %v288 = vpop.f32.mrf.mxu0
    %v289 = vadd.f32 0.0, %v288
    %290 = vmatmul.bf16.gmra.mxu0 %v121
    %v291 = vpop.f32.mrf.mxu0
    %v292 = vadd.f32 0.0, %v291
    %v293 = vpop.f32.mrf.mxu0
    %v294 = vadd.f32 0.0, %v293
    %295 = vmatmul.bf16.gmra.mxu0 %v122
    %v296 = vpop.f32.mrf.mxu0
    %v297 = vadd.f32 0.0, %v296
    %v298 = vpop.f32.mrf.mxu0
    %v299 = vadd.f32 0.0, %v298
    %300 = vmatmul.bf16.gmra.mxu0 %v123
    %v301 = vpop.f32.mrf.mxu0
    %v302 = vadd.f32 0.0, %v301
    %v303 = vpop.f32.mrf.mxu0
    %v304 = vadd.f32 0.0, %v303
    %305 = vmatmul.bf16.gmra.mxu0 %v124
    %v306 = vpop.f32.mrf.mxu0
    %v307 = vadd.f32 0.0, %v306
    %v308 = vpop.f32.mrf.mxu0
    %v309 = vadd.f32 0.0, %v308
    %310 = vdwg.mxu0
    %v311 = vld [vmem:[%s4] sm:$0x1]
    %v313 = vperm.slane %v311, 0
    %v315 = vadd.f32 %v223, %v313
    %v316 = vadd.f32 %v225, %v313
    %v317 = vadd.f32 %v228, %v313
    %v318 = vadd.f32 %v230, %v313
    %v319 = vadd.f32 %v233, %v313
    %v320 = vadd.f32 %v235, %v313
    %v321 = vadd.f32 %v238, %v313
    %v322 = vadd.f32 %v240, %v313
    %v323 = vadd.f32 %v243, %v313
    %v324 = vadd.f32 %v245, %v313
    %v325 = vadd.f32 %v248, %v313
    %v326 = vadd.f32 %v250, %v313
    %v327 = vadd.f32 %v253, %v313
    %v328 = vadd.f32 %v255, %v313
    %v329 = vadd.f32 %v258, %v313
    %v330 = vadd.f32 %v260, %v313
    %v331 = vpack.c.bf16 %v274, %v272
    %v332 = vpack.c.bf16 %v279, %v277
    %v333 = vpack.c.bf16 %v284, %v282
    %v334 = vpack.c.bf16 %v289, %v287
    %v335 = vpack.c.bf16 %v294, %v292
    %v336 = vpack.c.bf16 %v299, %v297
    %v337 = vpack.c.bf16 %v304, %v302
    %v338 = vpack.c.bf16 %v309, %v307
    %v339 = vld [vmem:[#allocation2] sm:$0xff]
    %v340 = vld [vmem:[#allocation2 + $0x8] sm:$0xff]
    %v341 = vld [vmem:[#allocation2 + $0x10] sm:$0xff]
    %v342 = vld [vmem:[#allocation2 + $0x18] sm:$0xff]
    %v343 = vunpack.c.0.s8 %v339
    %v344 = vunpack.c.1.s8 %v339
    %v345 = vunpack.c.2.s8 %v339
    %v346 = vunpack.c.3.s8 %v339
    %v347 = vunpack.c.0.s8 %v340
    %v348 = vunpack.c.1.s8 %v340
    %v349 = vunpack.c.2.s8 %v340
    %v350 = vunpack.c.3.s8 %v340
    %v351 = vunpack.c.0.s8 %v341
    %v352 = vunpack.c.1.s8 %v341
    %v353 = vunpack.c.2.s8 %v341
    %v354 = vunpack.c.3.s8 %v341
    %v355 = vunpack.c.0.s8 %v342
    %v356 = vunpack.c.1.s8 %v342
    %v357 = vunpack.c.2.s8 %v342
    %v358 = vunpack.c.3.s8 %v342
    %v359 = vcvt.s32.f32 %v343
    %v360 = vcvt.s32.f32 %v344
    %v361 = vcvt.s32.f32 %v345
    %v362 = vcvt.s32.f32 %v346
    %v363 = vcvt.s32.f32 %v347
    %v364 = vcvt.s32.f32 %v348
    %v365 = vcvt.s32.f32 %v349
    %v366 = vcvt.s32.f32 %v350
    %v367 = vcvt.s32.f32 %v351
    %v368 = vcvt.s32.f32 %v352
    %v369 = vcvt.s32.f32 %v353
    %v370 = vcvt.s32.f32 %v354
    %v371 = vcvt.s32.f32 %v355
    %v372 = vcvt.s32.f32 %v356
    %v373 = vcvt.s32.f32 %v357
    %v374 = vcvt.s32.f32 %v358
    %v375 = vpack.c.bf16 %v360, %v359
    %v376 = vpack.c.bf16 %v362, %v361
    %v377 = vpack.c.bf16 %v364, %v363
    %v378 = vpack.c.bf16 %v366, %v365
    %v379 = vpack.c.bf16 %v368, %v367
    %v380 = vpack.c.bf16 %v370, %v369
    %v381 = vpack.c.bf16 %v372, %v371
    %v382 = vpack.c.bf16 %v374, %v373
    %383 = vmatpush.bf16.msra.mxu0 %v338
    %384 = vmatpush.bf16.msra.mxu0 %v337
    %385 = vmatpush.bf16.msra.mxu0 %v336
    %386 = vmatpush.bf16.msra.mxu0 %v335
    %387 = vmatpush.bf16.msra.mxu0 %v334
    %388 = vmatpush.bf16.msra.mxu0 %v333
    %389 = vmatpush.bf16.msra.mxu0 %v332
    %390 = vmatpush.bf16.msra.mxu0 %v331
    %391 = vmatmul.bf16.gmra.mxu0 %v375
    %v392 = vpop.f32.mrf.mxu0
    %v393 = vadd.f32 0.0, %v392
    %v394 = vpop.f32.mrf.mxu0
    %v395 = vadd.f32 0.0, %v394
    %396 = vmatmul.bf16.gmra.mxu0 %v376
    %v397 = vpop.f32.mrf.mxu0
    %v398 = vadd.f32 0.0, %v397
    %v399 = vpop.f32.mrf.mxu0
    %v400 = vadd.f32 0.0, %v399
    %401 = vmatmul.bf16.gmra.mxu0 %v377
    %v402 = vpop.f32.mrf.mxu0
    %v403 = vadd.f32 0.0, %v402
    %v404 = vpop.f32.mrf.mxu0
    %v405 = vadd.f32 0.0, %v404
    %406 = vmatmul.bf16.gmra.mxu0 %v378
    %v407 = vpop.f32.mrf.mxu0
    %v408 = vadd.f32 0.0, %v407
    %v409 = vpop.f32.mrf.mxu0
    %v410 = vadd.f32 0.0, %v409
    %411 = vmatmul.bf16.gmra.mxu0 %v379
    %v412 = vpop.f32.mrf.mxu0
    %v413 = vadd.f32 0.0, %v412
    %v414 = vpop.f32.mrf.mxu0
    %v415 = vadd.f32 0.0, %v414
    %416 = vmatmul.bf16.gmra.mxu0 %v380
    %v417 = vpop.f32.mrf.mxu0
    %v418 = vadd.f32 0.0, %v417
    %v419 = vpop.f32.mrf.mxu0
    %v420 = vadd.f32 0.0, %v419
    %421 = vmatmul.bf16.gmra.mxu0 %v381
    %v422 = vpop.f32.mrf.mxu0
    %v423 = vadd.f32 0.0, %v422
    %v424 = vpop.f32.mrf.mxu0
    %v425 = vadd.f32 0.0, %v424
    %426 = vmatmul.bf16.gmra.mxu0 %v382
    %v427 = vpop.f32.mrf.mxu0
    %v428 = vadd.f32 0.0, %v427
    %v429 = vpop.f32.mrf.mxu0
    %v430 = vadd.f32 0.0, %v429
    %431 = vdwg.mxu0
    %v432 = vld [vmem:[%s1] sm:$0xff]
    %v433 = vld [vmem:[%s1 + $0x8] sm:$0xff]
    %v434 = vld [vmem:[%s1 + $0x10] sm:$0xff]
    %v435 = vld [vmem:[%s1 + $0x18] sm:$0xff]
    %v436 = vld [vmem:[%s1 + $0x20] sm:$0xff]
    %v437 = vld [vmem:[%s1 + $0x28] sm:$0xff]
    %v438 = vld [vmem:[%s1 + $0x30] sm:$0xff]
    %v439 = vld [vmem:[%s1 + $0x38] sm:$0xff]
    %v440 = vld [vmem:[%s1 + $0x40] sm:$0xff]
    %v441 = vld [vmem:[%s1 + $0x48] sm:$0xff]
    %v442 = vld [vmem:[%s1 + $0x50] sm:$0xff]
    %v443 = vld [vmem:[%s1 + $0x58] sm:$0xff]
    %v444 = vld [vmem:[%s1 + $0x60] sm:$0xff]
    %v445 = vld [vmem:[%s1 + $0x68] sm:$0xff]
    %v446 = vld [vmem:[%s1 + $0x70] sm:$0xff]
    %v447 = vld [vmem:[%s1 + $0x78] sm:$0xff]
    %449 = vset.pattern.permute.xlu0 0
    %450 = vperm.xlu0 %449, %v432
    %v451 = vpop.permute.xlu0 %450
    %454 = vset.pattern.permute.xlu0 0
    %455 = vperm.xlu0 %454, %v433
    %v456 = vpop.permute.xlu0 %455
    %459 = vset.pattern.permute.xlu0 0
    %460 = vperm.xlu0 %459, %v434
    %v461 = vpop.permute.xlu0 %460
    %464 = vset.pattern.permute.xlu0 0
    %465 = vperm.xlu0 %464, %v435
    %v466 = vpop.permute.xlu0 %465
    %469 = vset.pattern.permute.xlu0 0
    %470 = vperm.xlu0 %469, %v436
    %v471 = vpop.permute.xlu0 %470
    %474 = vset.pattern.permute.xlu0 0
    %475 = vperm.xlu0 %474, %v437
    %v476 = vpop.permute.xlu0 %475
    %479 = vset.pattern.permute.xlu0 0
    %480 = vperm.xlu0 %479, %v438
    %v481 = vpop.permute.xlu0 %480
    %484 = vset.pattern.permute.xlu0 0
    %485 = vperm.xlu0 %484, %v439
    %v486 = vpop.permute.xlu0 %485
    %489 = vset.pattern.permute.xlu0 0
    %490 = vperm.xlu0 %489, %v440
    %v491 = vpop.permute.xlu0 %490
    %494 = vset.pattern.permute.xlu0 0
    %495 = vperm.xlu0 %494, %v441
    %v496 = vpop.permute.xlu0 %495
    %499 = vset.pattern.permute.xlu0 0
    %500 = vperm.xlu0 %499, %v442
    %v501 = vpop.permute.xlu0 %500
    %504 = vset.pattern.permute.xlu0 0
    %505 = vperm.xlu0 %504, %v443
    %v506 = vpop.permute.xlu0 %505
    %509 = vset.pattern.permute.xlu0 0
    %510 = vperm.xlu0 %509, %v444
    %v511 = vpop.permute.xlu0 %510
    %514 = vset.pattern.permute.xlu0 0
    %515 = vperm.xlu0 %514, %v445
    %v516 = vpop.permute.xlu0 %515
    %519 = vset.pattern.permute.xlu0 0
    %520 = vperm.xlu0 %519, %v446
    %v521 = vpop.permute.xlu0 %520
    %524 = vset.pattern.permute.xlu0 0
    %525 = vperm.xlu0 %524, %v447
    %v526 = vpop.permute.xlu0 %525
    %v528 = vmul.f32 %v393, %v451
    %v529 = vmul.f32 %v395, %v456
    %v530 = vmul.f32 %v398, %v461
    %v531 = vmul.f32 %v400, %v466
    %v532 = vmul.f32 %v403, %v471
    %v533 = vmul.f32 %v405, %v476
    %v534 = vmul.f32 %v408, %v481
    %v535 = vmul.f32 %v410, %v486
    %v536 = vmul.f32 %v413, %v491
    %v537 = vmul.f32 %v415, %v496
    %v538 = vmul.f32 %v418, %v501
    %v539 = vmul.f32 %v420, %v506
    %v540 = vmul.f32 %v423, %v511
    %v541 = vmul.f32 %v425, %v516
    %v542 = vmul.f32 %v428, %v521
    %v543 = vmul.f32 %v430, %v526
    %v544 = vadd.f32 %v315, %v528
    %v545 = vadd.f32 %v316, %v529
    %v546 = vadd.f32 %v317, %v530
    %v547 = vadd.f32 %v318, %v531
    %v548 = vadd.f32 %v319, %v532
    %v549 = vadd.f32 %v320, %v533
    %v550 = vadd.f32 %v321, %v534
    %v551 = vadd.f32 %v322, %v535
    %v552 = vadd.f32 %v323, %v536
    %v553 = vadd.f32 %v324, %v537
    %v554 = vadd.f32 %v325, %v538
    %v555 = vadd.f32 %v326, %v539
    %v556 = vadd.f32 %v327, %v540
    %v557 = vadd.f32 %v328, %v541
    %v558 = vadd.f32 %v329, %v542
    %v559 = vadd.f32 %v330, %v543
    %v560 = vmul.f32 %v544, %v544
    %v561 = vmul.f32 %v545, %v545
    %v562 = vmul.f32 %v546, %v546
    %v563 = vmul.f32 %v547, %v547
    %v564 = vmul.f32 %v548, %v548
    %v565 = vmul.f32 %v549, %v549
    %v566 = vmul.f32 %v550, %v550
    %v567 = vmul.f32 %v551, %v551
    %v568 = vmul.f32 %v552, %v552
    %v569 = vmul.f32 %v553, %v553
    %v570 = vmul.f32 %v554, %v554
    %v571 = vmul.f32 %v555, %v555
    %v572 = vmul.f32 %v556, %v556
    %v573 = vmul.f32 %v557, %v557
    %v574 = vmul.f32 %v558, %v558
    %v575 = vmul.f32 %v559, %v559
    %576 = vadd.xlane.f32.xlu0 %v560
    %v577 = vpop.xlane.xlu0 %576
    %578 = vadd.xlane.f32.xlu0 %v561
    %v579 = vpop.xlane.xlu0 %578
    %580 = vadd.xlane.f32.xlu0 %v562
    %v581 = vpop.xlane.xlu0 %580
    %582 = vadd.xlane.f32.xlu0 %v563
    %v583 = vpop.xlane.xlu0 %582
    %584 = vadd.xlane.f32.xlu0 %v564
    %v585 = vpop.xlane.xlu0 %584
    %586 = vadd.xlane.f32.xlu0 %v565
    %v587 = vpop.xlane.xlu0 %586
    %588 = vadd.xlane.f32.xlu0 %v566
    %v589 = vpop.xlane.xlu0 %588
    %590 = vadd.xlane.f32.xlu0 %v567
    %v591 = vpop.xlane.xlu0 %590
    %592 = vadd.xlane.f32.xlu0 %v568
    %v593 = vpop.xlane.xlu0 %592
    %594 = vadd.xlane.f32.xlu0 %v569
    %v595 = vpop.xlane.xlu0 %594
    %596 = vadd.xlane.f32.xlu0 %v570
    %v597 = vpop.xlane.xlu0 %596
    %598 = vadd.xlane.f32.xlu0 %v571
    %v599 = vpop.xlane.xlu0 %598
    %600 = vadd.xlane.f32.xlu0 %v572
    %v601 = vpop.xlane.xlu0 %600
    %602 = vadd.xlane.f32.xlu0 %v573
    %v603 = vpop.xlane.xlu0 %602
    %604 = vadd.xlane.f32.xlu0 %v574
    %v605 = vpop.xlane.xlu0 %604
    %606 = vadd.xlane.f32.xlu0 %v575
    %v607 = vpop.xlane.xlu0 %606
    %v608 = vmax.f32 %v577, 1e-24
    %v609 = vmax.f32 %v579, 1e-24
    %v610 = vmax.f32 %v581, 1e-24
    %v611 = vmax.f32 %v583, 1e-24
    %v612 = vmax.f32 %v585, 1e-24
    %v613 = vmax.f32 %v587, 1e-24
    %v614 = vmax.f32 %v589, 1e-24
    %v615 = vmax.f32 %v591, 1e-24
    %v616 = vmax.f32 %v593, 1e-24
    %v617 = vmax.f32 %v595, 1e-24
    %v618 = vmax.f32 %v597, 1e-24
    %v619 = vmax.f32 %v599, 1e-24
    %v620 = vmax.f32 %v601, 1e-24
    %v621 = vmax.f32 %v603, 1e-24
    %v622 = vmax.f32 %v605, 1e-24
    %v623 = vmax.f32 %v607, 1e-24
    %v624 = vrsqrt.pop %v608
    %v625 = vmul.f32 %v624, %v608
    %v626 = vmul.f32 %v625, %v624
    %v627 = vmul.f32 0.5, %v626
    %v628 = vsub.f32 1.5, %v627
    %v629 = vmul.f32 %v624, %v628
    %vm630 = vweird.f32 %v608
    %vm631 = vweird.f32 %v624
    %vm632 = vmor %vm630, %vm631
    %v633 = vsel %vm632, %v624, %v629
    %v634 = vrsqrt.pop %v609
    %v635 = vmul.f32 %v634, %v609
    %v636 = vmul.f32 %v635, %v634
    %v637 = vmul.f32 0.5, %v636
    %v638 = vsub.f32 1.5, %v637
    %v639 = vmul.f32 %v634, %v638
    %vm640 = vweird.f32 %v609
    %vm641 = vweird.f32 %v634
    %vm642 = vmor %vm640, %vm641
    %v643 = vsel %vm642, %v634, %v639
    %v644 = vrsqrt.pop %v610
    %v645 = vmul.f32 %v644, %v610
    %v646 = vmul.f32 %v645, %v644
    %v647 = vmul.f32 0.5, %v646
    %v648 = vsub.f32 1.5, %v647
    %v649 = vmul.f32 %v644, %v648
    %vm650 = vweird.f32 %v610
    %vm651 = vweird.f32 %v644
    %vm652 = vmor %vm650, %vm651
    %v653 = vsel %vm652, %v644, %v649
    %v654 = vrsqrt.pop %v611
    %v655 = vmul.f32 %v654, %v611
    %v656 = vmul.f32 %v655, %v654
    %v657 = vmul.f32 0.5, %v656
    %v658 = vsub.f32 1.5, %v657
    %v659 = vmul.f32 %v654, %v658
    %vm660 = vweird.f32 %v611
    %vm661 = vweird.f32 %v654
    %vm662 = vmor %vm660, %vm661
    %v663 = vsel %vm662, %v654, %v659
    %v664 = vrsqrt.pop %v612
    %v665 = vmul.f32 %v664, %v612
    %v666 = vmul.f32 %v665, %v664
    %v667 = vmul.f32 0.5, %v666
    %v668 = vsub.f32 1.5, %v667
    %v669 = vmul.f32 %v664, %v668
    %vm670 = vweird.f32 %v612
    %vm671 = vweird.f32 %v664
    %vm672 = vmor %vm670, %vm671
    %v673 = vsel %vm672, %v664, %v669
    %v674 = vrsqrt.pop %v613
    %v675 = vmul.f32 %v674, %v613
    %v676 = vmul.f32 %v675, %v674
    %v677 = vmul.f32 0.5, %v676
    %v678 = vsub.f32 1.5, %v677
    %v679 = vmul.f32 %v674, %v678
    %vm680 = vweird.f32 %v613
    %vm681 = vweird.f32 %v674
    %vm682 = vmor %vm680, %vm681
    %v683 = vsel %vm682, %v674, %v679
    %v684 = vrsqrt.pop %v614
    %v685 = vmul.f32 %v684, %v614
    %v686 = vmul.f32 %v685, %v684
    %v687 = vmul.f32 0.5, %v686
    %v688 = vsub.f32 1.5, %v687
    %v689 = vmul.f32 %v684, %v688
    %vm690 = vweird.f32 %v614
    %vm691 = vweird.f32 %v684
    %vm692 = vmor %vm690, %vm691
    %v693 = vsel %vm692, %v684, %v689
    %v694 = vrsqrt.pop %v615
    %v695 = vmul.f32 %v694, %v615
    %v696 = vmul.f32 %v695, %v694
    %v697 = vmul.f32 0.5, %v696
    %v698 = vsub.f32 1.5, %v697
    %v699 = vmul.f32 %v694, %v698
    %vm700 = vweird.f32 %v615
    %vm701 = vweird.f32 %v694
    %vm702 = vmor %vm700, %vm701
    %v703 = vsel %vm702, %v694, %v699
    %v704 = vrsqrt.pop %v616
    %v705 = vmul.f32 %v704, %v616
    %v706 = vmul.f32 %v705, %v704
    %v707 = vmul.f32 0.5, %v706
    %v708 = vsub.f32 1.5, %v707
    %v709 = vmul.f32 %v704, %v708
    %vm710 = vweird.f32 %v616
    %vm711 = vweird.f32 %v704
    %vm712 = vmor %vm710, %vm711
    %v713 = vsel %vm712, %v704, %v709
    %v714 = vrsqrt.pop %v617
    %v715 = vmul.f32 %v714, %v617
    %v716 = vmul.f32 %v715, %v714
    %v717 = vmul.f32 0.5, %v716
    %v718 = vsub.f32 1.5, %v717
    %v719 = vmul.f32 %v714, %v718
    %vm720 = vweird.f32 %v617
    %vm721 = vweird.f32 %v714
    %vm722 = vmor %vm720, %vm721
    %v723 = vsel %vm722, %v714, %v719
    %v724 = vrsqrt.pop %v618
    %v725 = vmul.f32 %v724, %v618
    %v726 = vmul.f32 %v725, %v724
    %v727 = vmul.f32 0.5, %v726
    %v728 = vsub.f32 1.5, %v727
    %v729 = vmul.f32 %v724, %v728
    %vm730 = vweird.f32 %v618
    %vm731 = vweird.f32 %v724
    %vm732 = vmor %vm730, %vm731
    %v733 = vsel %vm732, %v724, %v729
    %v734 = vrsqrt.pop %v619
    %v735 = vmul.f32 %v734, %v619
    %v736 = vmul.f32 %v735, %v734
    %v737 = vmul.f32 0.5, %v736
    %v738 = vsub.f32 1.5, %v737
    %v739 = vmul.f32 %v734, %v738
    %vm740 = vweird.f32 %v619
    %vm741 = vweird.f32 %v734
    %vm742 = vmor %vm740, %vm741
    %v743 = vsel %vm742, %v734, %v739
    %v744 = vrsqrt.pop %v620
    %v745 = vmul.f32 %v744, %v620
    %v746 = vmul.f32 %v745, %v744
    %v747 = vmul.f32 0.5, %v746
    %v748 = vsub.f32 1.5, %v747
    %v749 = vmul.f32 %v744, %v748
    %vm750 = vweird.f32 %v620
    %vm751 = vweird.f32 %v744
    %vm752 = vmor %vm750, %vm751
    %v753 = vsel %vm752, %v744, %v749
    %v754 = vrsqrt.pop %v621
    %v755 = vmul.f32 %v754, %v621
    %v756 = vmul.f32 %v755, %v754
    %v757 = vmul.f32 0.5, %v756
    %v758 = vsub.f32 1.5, %v757
    %v759 = vmul.f32 %v754, %v758
    %vm760 = vweird.f32 %v621
    %vm761 = vweird.f32 %v754
    %vm762 = vmor %vm760, %vm761
    %v763 = vsel %vm762, %v754, %v759
    %v764 = vrsqrt.pop %v622
    %v765 = vmul.f32 %v764, %v622
    %v766 = vmul.f32 %v765, %v764
    %v767 = vmul.f32 0.5, %v766
    %v768 = vsub.f32 1.5, %v767
    %v769 = vmul.f32 %v764, %v768
    %vm770 = vweird.f32 %v622
    %vm771 = vweird.f32 %v764
    %vm772 = vmor %vm770, %vm771
    %v773 = vsel %vm772, %v764, %v769
    %v774 = vrsqrt.pop %v623
    %v775 = vmul.f32 %v774, %v623
    %v776 = vmul.f32 %v775, %v774
    %v777 = vmul.f32 0.5, %v776
    %v778 = vsub.f32 1.5, %v777
    %v779 = vmul.f32 %v774, %v778
    %vm780 = vweird.f32 %v623
    %vm781 = vweird.f32 %v774
    %vm782 = vmor %vm780, %vm781
    %v783 = vsel %vm782, %v774, %v779
    %v784 = vmul.f32 %v544, %v633
    %v785 = vmul.f32 %v545, %v643
    %v786 = vmul.f32 %v546, %v653
    %v787 = vmul.f32 %v547, %v663
    %v788 = vmul.f32 %v548, %v673
    %v789 = vmul.f32 %v549, %v683
    %v790 = vmul.f32 %v550, %v693
    %v791 = vmul.f32 %v551, %v703
    %v792 = vmul.f32 %v552, %v713
    %v793 = vmul.f32 %v553, %v723
    %v794 = vmul.f32 %v554, %v733
    %v795 = vmul.f32 %v555, %v743
    %v796 = vmul.f32 %v556, %v753
    %v797 = vmul.f32 %v557, %v763
    %v798 = vmul.f32 %v558, %v773
    %v799 = vmul.f32 %v559, %v783
    %800 = vst [vmem:[#allocation7] sm:$0xff] %v784
    %801 = vst [vmem:[#allocation7 + $0x8] sm:$0xff] %v785
    %802 = vst [vmem:[#allocation7 + $0x10] sm:$0xff] %v786
    %803 = vst [vmem:[#allocation7 + $0x18] sm:$0xff] %v787
    %804 = vst [vmem:[#allocation7 + $0x20] sm:$0xff] %v788
    %805 = vst [vmem:[#allocation7 + $0x28] sm:$0xff] %v789
    %806 = vst [vmem:[#allocation7 + $0x30] sm:$0xff] %v790
    %807 = vst [vmem:[#allocation7 + $0x38] sm:$0xff] %v791
    %808 = vst [vmem:[#allocation7 + $0x40] sm:$0xff] %v792
    %809 = vst [vmem:[#allocation7 + $0x48] sm:$0xff] %v793
    %810 = vst [vmem:[#allocation7 + $0x50] sm:$0xff] %v794
    %811 = vst [vmem:[#allocation7 + $0x58] sm:$0xff] %v795
    %812 = vst [vmem:[#allocation7 + $0x60] sm:$0xff] %v796
    %813 = vst [vmem:[#allocation7 + $0x68] sm:$0xff] %v797
    %814 = vst [vmem:[#allocation7 + $0x70] sm:$0xff] %v798
    %815 = vst [vmem:[#allocation7 + $0x78] sm:$0xff] %v799
    // Predicated region
    $region30: #{graphsage_forward.5} parent=1 // pred_check
      _
    $region31: #{graphsage_forward.5} parent=1 // pred_check_branch
      %817 = sbr.rel (0) target = $region33
    $region32: #{graphsage_forward.5} parent=1 // pred_region
      %819 = vsyncadd [#allocation4], 0
      %s820 = sshll.u32 [#allocation7], 4
      %s821 = int_to_ptr.vmem [resolvable:$true] %s820
      %s822 = sshll.u32 %s5, 4
      %s823 = int_to_ptr.hbm [resolvable:$true] %s822
      %828 = dma.vmem_to_hbm [thread:$0]  %s821, 2048, %s823, [#allocation4], 128, 128, 8
    $region33: #{graphsage_forward.5} parent=1 // pred_fallthru
      _
    // Predicated region
    $region34: #{graphsage_forward.5} parent=1 // pred_check
      _
    $region35: #{graphsage_forward.5} parent=1 // pred_check_branch
      %830 = sbr.rel (0) target = $region37
    $region36: #{graphsage_forward.5} parent=1 // pred_region
      %832 = dma.done [#allocation4], 2048
    $region37: #{graphsage_forward.5} parent=1 // pred_fallthru
      _
    %833 = vsyncpa [#allocation3], 1
    %834 = vsyncpa [#allocation6], 1
    %835 = vsyncpa [#allocation4], 1

// kernel: graphsage_forward.3
$region0: #{graphsage_forward.3}
  #allocation0 [shape = 'u32[]', space=smem, size = 0x4, offset = 0x4, fixed_abs, tag = 'smem constant byte address 0x4 - core index']
  #allocation1 [shape = 'u32[72,128]{1,0:T(1,128)}', space=vmem, size = 0x9000, scoped, tag = 'internal scratch']
  %s0 = inlined_call_operand.hbm [shape: s8[128,128], index: 0, kind: input, shape index: {}]
  %s1 = inlined_call_operand.vmem [shape: f32[128,1], index: 1, kind: input, shape index: {}]
  %s2 = inlined_call_operand.hbm [shape: bf16[128,128], index: 2, kind: input, shape index: {}]
  %s3 = inlined_call_operand.vmem [shape: bf16[128,256], index: 3, kind: input, shape index: {}]
  %s4 = inlined_call_operand.vmem [shape: f32[1,128], index: 4, kind: input, shape index: {}]
  %s5 = inlined_call_operand.vmem [shape: bf16[128,128], index: 5, kind: output, shape index: {}]
  %s6 = sld [smem:[#allocation0]]
  $region38: #{graphsage_forward.3} parent=0
    _
  %s8 = ssub.s32 1, %s6
  %s9 = scalar_select 0, %s8, %s6
  $region1: #{graphsage_forward.3} parent=0
    #allocation2 [shape = 'u8[16384]{0}', space=vmem, size = 0x4000, scoped, tag = 'input window, operand 0, single buffered']
    #allocation3 [shape = 's32[1]{0}', space=sflag, size = 0x4, scoped, tag = 'scoped memory for graphsage_forward.3']
    #allocation4 [shape = 'u8[32768]{0}', space=vmem, size = 0x8000, scoped, tag = 'input window, operand 2, single buffered']
    #allocation5 [shape = 's32[1]{0}', space=sflag, size = 0x4, scoped, tag = 'scoped memory for graphsage_forward.3']
    %10 = vsyncpa [#allocation3], 0
    %11 = vsyncpa [#allocation5], 0
    // Predicated region
    $region2: #{graphsage_forward.3} parent=1 // pred_check
      _
    $region3: #{graphsage_forward.3} parent=1 // pred_check_branch
      %13 = sbr.rel (0) target = $region5
    $region4: #{graphsage_forward.3} parent=1 // pred_region
      %15 = vsyncadd [#allocation3], 0
      %s16 = sshll.u32 %s0, 4
      %s17 = int_to_ptr.hbm [resolvable:$true] %s16
      %s18 = sshll.u32 [#allocation2], 4
      %s19 = int_to_ptr.vmem [resolvable:$true] %s18
      %24 = dma.hbm_to_vmem [thread:$0]  %s17, 512, %s19, [#allocation3], 128, 128, 8
    $region5: #{graphsage_forward.3} parent=1 // pred_fallthru
      _
    // Predicated region
    $region6: #{graphsage_forward.3} parent=1 // pred_check
      _
    $region7: #{graphsage_forward.3} parent=1 // pred_check_branch
      %26 = sbr.rel (0) target = $region9
    $region8: #{graphsage_forward.3} parent=1 // pred_region
      _
    $region9: #{graphsage_forward.3} parent=1 // pred_fallthru
      _
    // Predicated region
    $region10: #{graphsage_forward.3} parent=1 // pred_check
      _
    $region11: #{graphsage_forward.3} parent=1 // pred_check_branch
      %28 = sbr.rel (0) target = $region13
    $region12: #{graphsage_forward.3} parent=1 // pred_region
      %30 = vsyncadd [#allocation5], 0
      %s31 = sshll.u32 %s2, 4
      %s32 = int_to_ptr.hbm [resolvable:$true] %s31
      %s33 = sshll.u32 [#allocation4], 4
      %s34 = int_to_ptr.vmem [resolvable:$true] %s33
      %39 = dma.hbm_to_vmem [thread:$0]  %s32, 1024, %s34, [#allocation5], 64, 64, 4
    $region13: #{graphsage_forward.3} parent=1 // pred_fallthru
      _
    // Predicated region
    $region14: #{graphsage_forward.3} parent=1 // pred_check
      _
    $region15: #{graphsage_forward.3} parent=1 // pred_check_branch
      %41 = sbr.rel (0) target = $region17
    $region16: #{graphsage_forward.3} parent=1 // pred_region
      _
    $region17: #{graphsage_forward.3} parent=1 // pred_fallthru
      _
    // Predicated region
    $region18: #{graphsage_forward.3} parent=1 // pred_check
      _
    $region19: #{graphsage_forward.3} parent=1 // pred_check_branch
      %43 = sbr.rel (0) target = $region21
    $region20: #{graphsage_forward.3} parent=1 // pred_region
      _
    $region21: #{graphsage_forward.3} parent=1 // pred_fallthru
      _
    // Predicated region
    $region22: #{graphsage_forward.3} parent=1 // pred_check
      _
    $region23: #{graphsage_forward.3} parent=1 // pred_check_branch
      %45 = sbr.rel (0) target = $region25
    $region24: #{graphsage_forward.3} parent=1 // pred_region
      %47 = dma.done [#allocation3], 512
    $region25: #{graphsage_forward.3} parent=1 // pred_fallthru
      _
    // Predicated region
    $region26: #{graphsage_forward.3} parent=1 // pred_check
      _
    $region27: #{graphsage_forward.3} parent=1 // pred_check_branch
      %49 = sbr.rel (0) target = $region29
    $region28: #{graphsage_forward.3} parent=1 // pred_region
      %51 = dma.done [#allocation5], 1024
    $region29: #{graphsage_forward.3} parent=1 // pred_fallthru
      _
    %v52 = vld [vmem:[#allocation4] sm:$0xf]
    %v53 = vld [vmem:[#allocation4 + $0x4] sm:$0xf]
    %v54 = vld [vmem:[#allocation4 + $0x8] sm:$0xf]
    %v55 = vld [vmem:[#allocation4 + $0xc] sm:$0xf]
    %v56 = vld [vmem:[#allocation4 + $0x10] sm:$0xf]
    %v57 = vld [vmem:[#allocation4 + $0x14] sm:$0xf]
    %v58 = vld [vmem:[#allocation4 + $0x18] sm:$0xf]
    %v59 = vld [vmem:[#allocation4 + $0x1c] sm:$0xf]
    %v60 = vld [vmem:[#allocation4 + $0x20] sm:$0xf]
    %v61 = vld [vmem:[#allocation4 + $0x24] sm:$0xf]
    %v62 = vld [vmem:[#allocation4 + $0x28] sm:$0xf]
    %v63 = vld [vmem:[#allocation4 + $0x2c] sm:$0xf]
    %v64 = vld [vmem:[#allocation4 + $0x30] sm:$0xf]
    %v65 = vld [vmem:[#allocation4 + $0x34] sm:$0xf]
    %v66 = vld [vmem:[#allocation4 + $0x38] sm:$0xf]
    %v67 = vld [vmem:[#allocation4 + $0x3c] sm:$0xf]
    %v68 = vld [vmem:[%s3] sm:$0xff]
    %v69 = vld [vmem:[%s3 + $0x8] sm:$0xff]
    %v70 = vld [vmem:[%s3 + $0x10] sm:$0xff]
    %v71 = vld [vmem:[%s3 + $0x18] sm:$0xff]
    %v72 = vld [vmem:[%s3 + $0x20] sm:$0xff]
    %v73 = vld [vmem:[%s3 + $0x28] sm:$0xff]
    %v74 = vld [vmem:[%s3 + $0x30] sm:$0xff]
    %v75 = vld [vmem:[%s3 + $0x38] sm:$0xff]
    %v76 = vld [vmem:[%s3 + $0x40] sm:$0xff]
    %v77 = vld [vmem:[%s3 + $0x48] sm:$0xff]
    %v78 = vld [vmem:[%s3 + $0x50] sm:$0xff]
    %v79 = vld [vmem:[%s3 + $0x58] sm:$0xff]
    %v80 = vld [vmem:[%s3 + $0x60] sm:$0xff]
    %v81 = vld [vmem:[%s3 + $0x68] sm:$0xff]
    %v82 = vld [vmem:[%s3 + $0x70] sm:$0xff]
    %v83 = vld [vmem:[%s3 + $0x78] sm:$0xff]
    %v100 = vunpack.c.l.b16 %v52
    %v101 = vunpack.c.l.b16 %v53
    %v102 = vunpack.c.l.b16 %v54
    %v103 = vunpack.c.l.b16 %v55
    %v104 = vunpack.c.l.b16 %v56
    %v105 = vunpack.c.l.b16 %v57
    %v106 = vunpack.c.l.b16 %v58
    %v107 = vunpack.c.l.b16 %v59
    %v108 = vunpack.c.l.b16 %v60
    %v109 = vunpack.c.l.b16 %v61
    %v110 = vunpack.c.l.b16 %v62
    %v111 = vunpack.c.l.b16 %v63
    %v112 = vunpack.c.l.b16 %v64
    %v113 = vunpack.c.l.b16 %v65
    %v114 = vunpack.c.l.b16 %v66
    %v115 = vunpack.c.l.b16 %v67
    %v116 = vpack.c.b16 %v101, %v100
    %v117 = vpack.c.b16 %v103, %v102
    %v118 = vpack.c.b16 %v105, %v104
    %v119 = vpack.c.b16 %v107, %v106
    %v120 = vpack.c.b16 %v109, %v108
    %v121 = vpack.c.b16 %v111, %v110
    %v122 = vpack.c.b16 %v113, %v112
    %v123 = vpack.c.b16 %v115, %v114
    %v148 = vunpack.c.l.b16 %v68
    %v149 = vunpack.c.h.b16 %v68
    %v150 = vunpack.c.l.b16 %v69
    %v151 = vunpack.c.h.b16 %v69
    %v152 = vunpack.c.l.b16 %v70
    %v153 = vunpack.c.h.b16 %v70
    %v154 = vunpack.c.l.b16 %v71
    %v155 = vunpack.c.h.b16 %v71
    %v156 = vunpack.c.l.b16 %v72
    %v157 = vunpack.c.h.b16 %v72
    %v158 = vunpack.c.l.b16 %v73
    %v159 = vunpack.c.h.b16 %v73
    %v160 = vunpack.c.l.b16 %v74
    %v161 = vunpack.c.h.b16 %v74
    %v162 = vunpack.c.l.b16 %v75
    %v163 = vunpack.c.h.b16 %v75
    %v164 = vunpack.c.l.b16 %v76
    %v165 = vunpack.c.h.b16 %v76
    %v166 = vunpack.c.l.b16 %v77
    %v167 = vunpack.c.h.b16 %v77
    %v168 = vunpack.c.l.b16 %v78
    %v169 = vunpack.c.h.b16 %v78
    %v170 = vunpack.c.l.b16 %v79
    %v171 = vunpack.c.h.b16 %v79
    %v172 = vunpack.c.l.b16 %v80
    %v173 = vunpack.c.h.b16 %v80
    %v174 = vunpack.c.l.b16 %v81
    %v175 = vunpack.c.h.b16 %v81
    %v176 = vunpack.c.l.b16 %v82
    %v177 = vunpack.c.h.b16 %v82
    %v178 = vunpack.c.l.b16 %v83
    %v179 = vunpack.c.h.b16 %v83
    %v180 = vpack.c.b16 %v150, %v148
    %v181 = vpack.c.b16 %v151, %v149
    %v182 = vpack.c.b16 %v154, %v152
    %v183 = vpack.c.b16 %v155, %v153
    %v184 = vpack.c.b16 %v158, %v156
    %v185 = vpack.c.b16 %v159, %v157
    %v186 = vpack.c.b16 %v162, %v160
    %v187 = vpack.c.b16 %v163, %v161
    %v188 = vpack.c.b16 %v166, %v164
    %v189 = vpack.c.b16 %v167, %v165
    %v190 = vpack.c.b16 %v170, %v168
    %v191 = vpack.c.b16 %v171, %v169
    %v192 = vpack.c.b16 %v174, %v172
    %v193 = vpack.c.b16 %v175, %v173
    %v194 = vpack.c.b16 %v178, %v176
    %v195 = vpack.c.b16 %v179, %v177
    %212 = vmatpush.bf16.msra.mxu0 %v194
    %213 = vmatpush.bf16.msra.mxu0 %v192
    %214 = vmatpush.bf16.msra.mxu0 %v190
    %215 = vmatpush.bf16.msra.mxu0 %v188
    %216 = vmatpush.bf16.msra.mxu0 %v186
    %217 = vmatpush.bf16.msra.mxu0 %v184
    %218 = vmatpush.bf16.msra.mxu0 %v182
    %219 = vmatpush.bf16.msra.mxu0 %v180
    %220 = vmatmul.bf16.gmra.mxu0 %v116
    %v221 = vpop.f32.mrf.mxu0
    %v222 = vadd.f32 0.0, %v221
    %v223 = vpop.f32.mrf.mxu0
    %v224 = vadd.f32 0.0, %v223
    %225 = vmatmul.bf16.gmra.mxu0 %v117
    %v226 = vpop.f32.mrf.mxu0
    %v227 = vadd.f32 0.0, %v226
    %v228 = vpop.f32.mrf.mxu0
    %v229 = vadd.f32 0.0, %v228
    %230 = vmatmul.bf16.gmra.mxu0 %v118
    %v231 = vpop.f32.mrf.mxu0
    %v232 = vadd.f32 0.0, %v231
    %v233 = vpop.f32.mrf.mxu0
    %v234 = vadd.f32 0.0, %v233
    %235 = vmatmul.bf16.gmra.mxu0 %v119
    %v236 = vpop.f32.mrf.mxu0
    %v237 = vadd.f32 0.0, %v236
    %v238 = vpop.f32.mrf.mxu0
    %v239 = vadd.f32 0.0, %v238
    %240 = vmatmul.bf16.gmra.mxu0 %v120
    %v241 = vpop.f32.mrf.mxu0
    %v242 = vadd.f32 0.0, %v241
    %v243 = vpop.f32.mrf.mxu0
    %v244 = vadd.f32 0.0, %v243
    %245 = vmatmul.bf16.gmra.mxu0 %v121
    %v246 = vpop.f32.mrf.mxu0
    %v247 = vadd.f32 0.0, %v246
    %v248 = vpop.f32.mrf.mxu0
    %v249 = vadd.f32 0.0, %v248
    %250 = vmatmul.bf16.gmra.mxu0 %v122
    %v251 = vpop.f32.mrf.mxu0
    %v252 = vadd.f32 0.0, %v251
    %v253 = vpop.f32.mrf.mxu0
    %v254 = vadd.f32 0.0, %v253
    %255 = vmatmul.bf16.gmra.mxu0 %v123
    %v256 = vpop.f32.mrf.mxu0
    %v257 = vadd.f32 0.0, %v256
    %v258 = vpop.f32.mrf.mxu0
    %v259 = vadd.f32 0.0, %v258
    %260 = vdwg.mxu0
    %261 = vmatpush.bf16.msra.mxu0 %v195
    %262 = vmatpush.bf16.msra.mxu0 %v193
    %263 = vmatpush.bf16.msra.mxu0 %v191
    %264 = vmatpush.bf16.msra.mxu0 %v189
    %265 = vmatpush.bf16.msra.mxu0 %v187
    %266 = vmatpush.bf16.msra.mxu0 %v185
    %267 = vmatpush.bf16.msra.mxu0 %v183
    %268 = vmatpush.bf16.msra.mxu0 %v181
    %269 = vmatmul.bf16.gmra.mxu0 %v116
    %v270 = vpop.f32.mrf.mxu0
    %v271 = vadd.f32 0.0, %v270
    %v272 = vpop.f32.mrf.mxu0
    %v273 = vadd.f32 0.0, %v272
    %274 = vmatmul.bf16.gmra.mxu0 %v117
    %v275 = vpop.f32.mrf.mxu0
    %v276 = vadd.f32 0.0, %v275
    %v277 = vpop.f32.mrf.mxu0
    %v278 = vadd.f32 0.0, %v277
    %279 = vmatmul.bf16.gmra.mxu0 %v118
    %v280 = vpop.f32.mrf.mxu0
    %v281 = vadd.f32 0.0, %v280
    %v282 = vpop.f32.mrf.mxu0
    %v283 = vadd.f32 0.0, %v282
    %284 = vmatmul.bf16.gmra.mxu0 %v119
    %v285 = vpop.f32.mrf.mxu0
    %v286 = vadd.f32 0.0, %v285
    %v287 = vpop.f32.mrf.mxu0
    %v288 = vadd.f32 0.0, %v287
    %289 = vmatmul.bf16.gmra.mxu0 %v120
    %v290 = vpop.f32.mrf.mxu0
    %v291 = vadd.f32 0.0, %v290
    %v292 = vpop.f32.mrf.mxu0
    %v293 = vadd.f32 0.0, %v292
    %294 = vmatmul.bf16.gmra.mxu0 %v121
    %v295 = vpop.f32.mrf.mxu0
    %v296 = vadd.f32 0.0, %v295
    %v297 = vpop.f32.mrf.mxu0
    %v298 = vadd.f32 0.0, %v297
    %299 = vmatmul.bf16.gmra.mxu0 %v122
    %v300 = vpop.f32.mrf.mxu0
    %v301 = vadd.f32 0.0, %v300
    %v302 = vpop.f32.mrf.mxu0
    %v303 = vadd.f32 0.0, %v302
    %304 = vmatmul.bf16.gmra.mxu0 %v123
    %v305 = vpop.f32.mrf.mxu0
    %v306 = vadd.f32 0.0, %v305
    %v307 = vpop.f32.mrf.mxu0
    %v308 = vadd.f32 0.0, %v307
    %309 = vdwg.mxu0
    %v310 = vld [vmem:[%s4] sm:$0x1]
    %v312 = vperm.slane %v310, 0
    %v314 = vadd.f32 %v222, %v312
    %v315 = vadd.f32 %v224, %v312
    %v316 = vadd.f32 %v227, %v312
    %v317 = vadd.f32 %v229, %v312
    %v318 = vadd.f32 %v232, %v312
    %v319 = vadd.f32 %v234, %v312
    %v320 = vadd.f32 %v237, %v312
    %v321 = vadd.f32 %v239, %v312
    %v322 = vadd.f32 %v242, %v312
    %v323 = vadd.f32 %v244, %v312
    %v324 = vadd.f32 %v247, %v312
    %v325 = vadd.f32 %v249, %v312
    %v326 = vadd.f32 %v252, %v312
    %v327 = vadd.f32 %v254, %v312
    %v328 = vadd.f32 %v257, %v312
    %v329 = vadd.f32 %v259, %v312
    %v330 = vpack.c.bf16 %v273, %v271
    %v331 = vpack.c.bf16 %v278, %v276
    %v332 = vpack.c.bf16 %v283, %v281
    %v333 = vpack.c.bf16 %v288, %v286
    %v334 = vpack.c.bf16 %v293, %v291
    %v335 = vpack.c.bf16 %v298, %v296
    %v336 = vpack.c.bf16 %v303, %v301
    %v337 = vpack.c.bf16 %v308, %v306
    %v338 = vld [vmem:[#allocation2] sm:$0xff]
    %v339 = vld [vmem:[#allocation2 + $0x8] sm:$0xff]
    %v340 = vld [vmem:[#allocation2 + $0x10] sm:$0xff]
    %v341 = vld [vmem:[#allocation2 + $0x18] sm:$0xff]
    %v342 = vunpack.c.0.s8 %v338
    %v343 = vunpack.c.1.s8 %v338
    %v344 = vunpack.c.2.s8 %v338
    %v345 = vunpack.c.3.s8 %v338
    %v346 = vunpack.c.0.s8 %v339
    %v347 = vunpack.c.1.s8 %v339
    %v348 = vunpack.c.2.s8 %v339
    %v349 = vunpack.c.3.s8 %v339
    %v350 = vunpack.c.0.s8 %v340
    %v351 = vunpack.c.1.s8 %v340
    %v352 = vunpack.c.2.s8 %v340
    %v353 = vunpack.c.3.s8 %v340
    %v354 = vunpack.c.0.s8 %v341
    %v355 = vunpack.c.1.s8 %v341
    %v356 = vunpack.c.2.s8 %v341
    %v357 = vunpack.c.3.s8 %v341
    %v358 = vcvt.s32.f32 %v342
    %v359 = vcvt.s32.f32 %v343
    %v360 = vcvt.s32.f32 %v344
    %v361 = vcvt.s32.f32 %v345
    %v362 = vcvt.s32.f32 %v346
    %v363 = vcvt.s32.f32 %v347
    %v364 = vcvt.s32.f32 %v348
    %v365 = vcvt.s32.f32 %v349
    %v366 = vcvt.s32.f32 %v350
    %v367 = vcvt.s32.f32 %v351
    %v368 = vcvt.s32.f32 %v352
    %v369 = vcvt.s32.f32 %v353
    %v370 = vcvt.s32.f32 %v354
    %v371 = vcvt.s32.f32 %v355
    %v372 = vcvt.s32.f32 %v356
    %v373 = vcvt.s32.f32 %v357
    %v374 = vpack.c.bf16 %v359, %v358
    %v375 = vpack.c.bf16 %v361, %v360
    %v376 = vpack.c.bf16 %v363, %v362
    %v377 = vpack.c.bf16 %v365, %v364
    %v378 = vpack.c.bf16 %v367, %v366
    %v379 = vpack.c.bf16 %v369, %v368
    %v380 = vpack.c.bf16 %v371, %v370
    %v381 = vpack.c.bf16 %v373, %v372
    %382 = vmatpush.bf16.msra.mxu0 %v337
    %383 = vmatpush.bf16.msra.mxu0 %v336
    %384 = vmatpush.bf16.msra.mxu0 %v335
    %385 = vmatpush.bf16.msra.mxu0 %v334
    %386 = vmatpush.bf16.msra.mxu0 %v333
    %387 = vmatpush.bf16.msra.mxu0 %v332
    %388 = vmatpush.bf16.msra.mxu0 %v331
    %389 = vmatpush.bf16.msra.mxu0 %v330
    %390 = vmatmul.bf16.gmra.mxu0 %v374
    %v391 = vpop.f32.mrf.mxu0
    %v392 = vadd.f32 0.0, %v391
    %v393 = vpop.f32.mrf.mxu0
    %v394 = vadd.f32 0.0, %v393
    %395 = vmatmul.bf16.gmra.mxu0 %v375
    %v396 = vpop.f32.mrf.mxu0
    %v397 = vadd.f32 0.0, %v396
    %v398 = vpop.f32.mrf.mxu0
    %v399 = vadd.f32 0.0, %v398
    %400 = vmatmul.bf16.gmra.mxu0 %v376
    %v401 = vpop.f32.mrf.mxu0
    %v402 = vadd.f32 0.0, %v401
    %v403 = vpop.f32.mrf.mxu0
    %v404 = vadd.f32 0.0, %v403
    %405 = vmatmul.bf16.gmra.mxu0 %v377
    %v406 = vpop.f32.mrf.mxu0
    %v407 = vadd.f32 0.0, %v406
    %v408 = vpop.f32.mrf.mxu0
    %v409 = vadd.f32 0.0, %v408
    %410 = vmatmul.bf16.gmra.mxu0 %v378
    %v411 = vpop.f32.mrf.mxu0
    %v412 = vadd.f32 0.0, %v411
    %v413 = vpop.f32.mrf.mxu0
    %v414 = vadd.f32 0.0, %v413
    %415 = vmatmul.bf16.gmra.mxu0 %v379
    %v416 = vpop.f32.mrf.mxu0
    %v417 = vadd.f32 0.0, %v416
    %v418 = vpop.f32.mrf.mxu0
    %v419 = vadd.f32 0.0, %v418
    %420 = vmatmul.bf16.gmra.mxu0 %v380
    %v421 = vpop.f32.mrf.mxu0
    %v422 = vadd.f32 0.0, %v421
    %v423 = vpop.f32.mrf.mxu0
    %v424 = vadd.f32 0.0, %v423
    %425 = vmatmul.bf16.gmra.mxu0 %v381
    %v426 = vpop.f32.mrf.mxu0
    %v427 = vadd.f32 0.0, %v426
    %v428 = vpop.f32.mrf.mxu0
    %v429 = vadd.f32 0.0, %v428
    %430 = vdwg.mxu0
    %v431 = vld [vmem:[%s1] sm:$0xff]
    %v432 = vld [vmem:[%s1 + $0x8] sm:$0xff]
    %v433 = vld [vmem:[%s1 + $0x10] sm:$0xff]
    %v434 = vld [vmem:[%s1 + $0x18] sm:$0xff]
    %v435 = vld [vmem:[%s1 + $0x20] sm:$0xff]
    %v436 = vld [vmem:[%s1 + $0x28] sm:$0xff]
    %v437 = vld [vmem:[%s1 + $0x30] sm:$0xff]
    %v438 = vld [vmem:[%s1 + $0x38] sm:$0xff]
    %v439 = vld [vmem:[%s1 + $0x40] sm:$0xff]
    %v440 = vld [vmem:[%s1 + $0x48] sm:$0xff]
    %v441 = vld [vmem:[%s1 + $0x50] sm:$0xff]
    %v442 = vld [vmem:[%s1 + $0x58] sm:$0xff]
    %v443 = vld [vmem:[%s1 + $0x60] sm:$0xff]
    %v444 = vld [vmem:[%s1 + $0x68] sm:$0xff]
    %v445 = vld [vmem:[%s1 + $0x70] sm:$0xff]
    %v446 = vld [vmem:[%s1 + $0x78] sm:$0xff]
    %448 = vset.pattern.permute.xlu0 0
    %449 = vperm.xlu0 %448, %v431
    %v450 = vpop.permute.xlu0 %449
    %453 = vset.pattern.permute.xlu0 0
    %454 = vperm.xlu0 %453, %v432
    %v455 = vpop.permute.xlu0 %454
    %458 = vset.pattern.permute.xlu0 0
    %459 = vperm.xlu0 %458, %v433
    %v460 = vpop.permute.xlu0 %459
    %463 = vset.pattern.permute.xlu0 0
    %464 = vperm.xlu0 %463, %v434
    %v465 = vpop.permute.xlu0 %464
    %468 = vset.pattern.permute.xlu0 0
    %469 = vperm.xlu0 %468, %v435
    %v470 = vpop.permute.xlu0 %469
    %473 = vset.pattern.permute.xlu0 0
    %474 = vperm.xlu0 %473, %v436
    %v475 = vpop.permute.xlu0 %474
    %478 = vset.pattern.permute.xlu0 0
    %479 = vperm.xlu0 %478, %v437
    %v480 = vpop.permute.xlu0 %479
    %483 = vset.pattern.permute.xlu0 0
    %484 = vperm.xlu0 %483, %v438
    %v485 = vpop.permute.xlu0 %484
    %488 = vset.pattern.permute.xlu0 0
    %489 = vperm.xlu0 %488, %v439
    %v490 = vpop.permute.xlu0 %489
    %493 = vset.pattern.permute.xlu0 0
    %494 = vperm.xlu0 %493, %v440
    %v495 = vpop.permute.xlu0 %494
    %498 = vset.pattern.permute.xlu0 0
    %499 = vperm.xlu0 %498, %v441
    %v500 = vpop.permute.xlu0 %499
    %503 = vset.pattern.permute.xlu0 0
    %504 = vperm.xlu0 %503, %v442
    %v505 = vpop.permute.xlu0 %504
    %508 = vset.pattern.permute.xlu0 0
    %509 = vperm.xlu0 %508, %v443
    %v510 = vpop.permute.xlu0 %509
    %513 = vset.pattern.permute.xlu0 0
    %514 = vperm.xlu0 %513, %v444
    %v515 = vpop.permute.xlu0 %514
    %518 = vset.pattern.permute.xlu0 0
    %519 = vperm.xlu0 %518, %v445
    %v520 = vpop.permute.xlu0 %519
    %523 = vset.pattern.permute.xlu0 0
    %524 = vperm.xlu0 %523, %v446
    %v525 = vpop.permute.xlu0 %524
    %v527 = vmul.f32 %v392, %v450
    %v528 = vmul.f32 %v394, %v455
    %v529 = vmul.f32 %v397, %v460
    %v530 = vmul.f32 %v399, %v465
    %v531 = vmul.f32 %v402, %v470
    %v532 = vmul.f32 %v404, %v475
    %v533 = vmul.f32 %v407, %v480
    %v534 = vmul.f32 %v409, %v485
    %v535 = vmul.f32 %v412, %v490
    %v536 = vmul.f32 %v414, %v495
    %v537 = vmul.f32 %v417, %v500
    %v538 = vmul.f32 %v419, %v505
    %v539 = vmul.f32 %v422, %v510
    %v540 = vmul.f32 %v424, %v515
    %v541 = vmul.f32 %v427, %v520
    %v542 = vmul.f32 %v429, %v525
    %v543 = vadd.f32 %v314, %v527
    %v544 = vadd.f32 %v315, %v528
    %v545 = vadd.f32 %v316, %v529
    %v546 = vadd.f32 %v317, %v530
    %v547 = vadd.f32 %v318, %v531
    %v548 = vadd.f32 %v319, %v532
    %v549 = vadd.f32 %v320, %v533
    %v550 = vadd.f32 %v321, %v534
    %v551 = vadd.f32 %v322, %v535
    %v552 = vadd.f32 %v323, %v536
    %v553 = vadd.f32 %v324, %v537
    %v554 = vadd.f32 %v325, %v538
    %v555 = vadd.f32 %v326, %v539
    %v556 = vadd.f32 %v327, %v540
    %v557 = vadd.f32 %v328, %v541
    %v558 = vadd.f32 %v329, %v542
    %v559 = vmul.f32 %v543, %v543
    %v560 = vmul.f32 %v544, %v544
    %v561 = vmul.f32 %v545, %v545
    %v562 = vmul.f32 %v546, %v546
    %v563 = vmul.f32 %v547, %v547
    %v564 = vmul.f32 %v548, %v548
    %v565 = vmul.f32 %v549, %v549
    %v566 = vmul.f32 %v550, %v550
    %v567 = vmul.f32 %v551, %v551
    %v568 = vmul.f32 %v552, %v552
    %v569 = vmul.f32 %v553, %v553
    %v570 = vmul.f32 %v554, %v554
    %v571 = vmul.f32 %v555, %v555
    %v572 = vmul.f32 %v556, %v556
    %v573 = vmul.f32 %v557, %v557
    %v574 = vmul.f32 %v558, %v558
    %575 = vadd.xlane.f32.xlu0 %v559
    %v576 = vpop.xlane.xlu0 %575
    %577 = vadd.xlane.f32.xlu0 %v560
    %v578 = vpop.xlane.xlu0 %577
    %579 = vadd.xlane.f32.xlu0 %v561
    %v580 = vpop.xlane.xlu0 %579
    %581 = vadd.xlane.f32.xlu0 %v562
    %v582 = vpop.xlane.xlu0 %581
    %583 = vadd.xlane.f32.xlu0 %v563
    %v584 = vpop.xlane.xlu0 %583
    %585 = vadd.xlane.f32.xlu0 %v564
    %v586 = vpop.xlane.xlu0 %585
    %587 = vadd.xlane.f32.xlu0 %v565
    %v588 = vpop.xlane.xlu0 %587
    %589 = vadd.xlane.f32.xlu0 %v566
    %v590 = vpop.xlane.xlu0 %589
    %591 = vadd.xlane.f32.xlu0 %v567
    %v592 = vpop.xlane.xlu0 %591
    %593 = vadd.xlane.f32.xlu0 %v568
    %v594 = vpop.xlane.xlu0 %593
    %595 = vadd.xlane.f32.xlu0 %v569
    %v596 = vpop.xlane.xlu0 %595
    %597 = vadd.xlane.f32.xlu0 %v570
    %v598 = vpop.xlane.xlu0 %597
    %599 = vadd.xlane.f32.xlu0 %v571
    %v600 = vpop.xlane.xlu0 %599
    %601 = vadd.xlane.f32.xlu0 %v572
    %v602 = vpop.xlane.xlu0 %601
    %603 = vadd.xlane.f32.xlu0 %v573
    %v604 = vpop.xlane.xlu0 %603
    %605 = vadd.xlane.f32.xlu0 %v574
    %v606 = vpop.xlane.xlu0 %605
    %v607 = vmax.f32 %v576, 1e-24
    %v608 = vmax.f32 %v578, 1e-24
    %v609 = vmax.f32 %v580, 1e-24
    %v610 = vmax.f32 %v582, 1e-24
    %v611 = vmax.f32 %v584, 1e-24
    %v612 = vmax.f32 %v586, 1e-24
    %v613 = vmax.f32 %v588, 1e-24
    %v614 = vmax.f32 %v590, 1e-24
    %v615 = vmax.f32 %v592, 1e-24
    %v616 = vmax.f32 %v594, 1e-24
    %v617 = vmax.f32 %v596, 1e-24
    %v618 = vmax.f32 %v598, 1e-24
    %v619 = vmax.f32 %v600, 1e-24
    %v620 = vmax.f32 %v602, 1e-24
    %v621 = vmax.f32 %v604, 1e-24
    %v622 = vmax.f32 %v606, 1e-24
    %v623 = vrsqrt.pop %v607
    %v624 = vmul.f32 %v623, %v607
    %v625 = vmul.f32 %v624, %v623
    %v626 = vmul.f32 0.5, %v625
    %v627 = vsub.f32 1.5, %v626
    %v628 = vmul.f32 %v623, %v627
    %vm629 = vweird.f32 %v607
    %vm630 = vweird.f32 %v623
    %vm631 = vmor %vm629, %vm630
    %v632 = vsel %vm631, %v623, %v628
    %v633 = vrsqrt.pop %v608
    %v634 = vmul.f32 %v633, %v608
    %v635 = vmul.f32 %v634, %v633
    %v636 = vmul.f32 0.5, %v635
    %v637 = vsub.f32 1.5, %v636
    %v638 = vmul.f32 %v633, %v637
    %vm639 = vweird.f32 %v608
    %vm640 = vweird.f32 %v633
    %vm641 = vmor %vm639, %vm640
    %v642 = vsel %vm641, %v633, %v638
    %v643 = vrsqrt.pop %v609
    %v644 = vmul.f32 %v643, %v609
    %v645 = vmul.f32 %v644, %v643
    %v646 = vmul.f32 0.5, %v645
    %v647 = vsub.f32 1.5, %v646
    %v648 = vmul.f32 %v643, %v647
    %vm649 = vweird.f32 %v609
    %vm650 = vweird.f32 %v643
    %vm651 = vmor %vm649, %vm650
    %v652 = vsel %vm651, %v643, %v648
    %v653 = vrsqrt.pop %v610
    %v654 = vmul.f32 %v653, %v610
    %v655 = vmul.f32 %v654, %v653
    %v656 = vmul.f32 0.5, %v655
    %v657 = vsub.f32 1.5, %v656
    %v658 = vmul.f32 %v653, %v657
    %vm659 = vweird.f32 %v610
    %vm660 = vweird.f32 %v653
    %vm661 = vmor %vm659, %vm660
    %v662 = vsel %vm661, %v653, %v658
    %v663 = vrsqrt.pop %v611
    %v664 = vmul.f32 %v663, %v611
    %v665 = vmul.f32 %v664, %v663
    %v666 = vmul.f32 0.5, %v665
    %v667 = vsub.f32 1.5, %v666
    %v668 = vmul.f32 %v663, %v667
    %vm669 = vweird.f32 %v611
    %vm670 = vweird.f32 %v663
    %vm671 = vmor %vm669, %vm670
    %v672 = vsel %vm671, %v663, %v668
    %v673 = vrsqrt.pop %v612
    %v674 = vmul.f32 %v673, %v612
    %v675 = vmul.f32 %v674, %v673
    %v676 = vmul.f32 0.5, %v675
    %v677 = vsub.f32 1.5, %v676
    %v678 = vmul.f32 %v673, %v677
    %vm679 = vweird.f32 %v612
    %vm680 = vweird.f32 %v673
    %vm681 = vmor %vm679, %vm680
    %v682 = vsel %vm681, %v673, %v678
    %v683 = vrsqrt.pop %v613
    %v684 = vmul.f32 %v683, %v613
    %v685 = vmul.f32 %v684, %v683
    %v686 = vmul.f32 0.5, %v685
    %v687 = vsub.f32 1.5, %v686
    %v688 = vmul.f32 %v683, %v687
    %vm689 = vweird.f32 %v613
    %vm690 = vweird.f32 %v683
    %vm691 = vmor %vm689, %vm690
    %v692 = vsel %vm691, %v683, %v688
    %v693 = vrsqrt.pop %v614
    %v694 = vmul.f32 %v693, %v614
    %v695 = vmul.f32 %v694, %v693
    %v696 = vmul.f32 0.5, %v695
    %v697 = vsub.f32 1.5, %v696
    %v698 = vmul.f32 %v693, %v697
    %vm699 = vweird.f32 %v614
    %vm700 = vweird.f32 %v693
    %vm701 = vmor %vm699, %vm700
    %v702 = vsel %vm701, %v693, %v698
    %v703 = vrsqrt.pop %v615
    %v704 = vmul.f32 %v703, %v615
    %v705 = vmul.f32 %v704, %v703
    %v706 = vmul.f32 0.5, %v705
    %v707 = vsub.f32 1.5, %v706
    %v708 = vmul.f32 %v703, %v707
    %vm709 = vweird.f32 %v615
    %vm710 = vweird.f32 %v703
    %vm711 = vmor %vm709, %vm710
    %v712 = vsel %vm711, %v703, %v708
    %v713 = vrsqrt.pop %v616
    %v714 = vmul.f32 %v713, %v616
    %v715 = vmul.f32 %v714, %v713
    %v716 = vmul.f32 0.5, %v715
    %v717 = vsub.f32 1.5, %v716
    %v718 = vmul.f32 %v713, %v717
    %vm719 = vweird.f32 %v616
    %vm720 = vweird.f32 %v713
    %vm721 = vmor %vm719, %vm720
    %v722 = vsel %vm721, %v713, %v718
    %v723 = vrsqrt.pop %v617
    %v724 = vmul.f32 %v723, %v617
    %v725 = vmul.f32 %v724, %v723
    %v726 = vmul.f32 0.5, %v725
    %v727 = vsub.f32 1.5, %v726
    %v728 = vmul.f32 %v723, %v727
    %vm729 = vweird.f32 %v617
    %vm730 = vweird.f32 %v723
    %vm731 = vmor %vm729, %vm730
    %v732 = vsel %vm731, %v723, %v728
    %v733 = vrsqrt.pop %v618
    %v734 = vmul.f32 %v733, %v618
    %v735 = vmul.f32 %v734, %v733
    %v736 = vmul.f32 0.5, %v735
    %v737 = vsub.f32 1.5, %v736
    %v738 = vmul.f32 %v733, %v737
    %vm739 = vweird.f32 %v618
    %vm740 = vweird.f32 %v733
    %vm741 = vmor %vm739, %vm740
    %v742 = vsel %vm741, %v733, %v738
    %v743 = vrsqrt.pop %v619
    %v744 = vmul.f32 %v743, %v619
    %v745 = vmul.f32 %v744, %v743
    %v746 = vmul.f32 0.5, %v745
    %v747 = vsub.f32 1.5, %v746
    %v748 = vmul.f32 %v743, %v747
    %vm749 = vweird.f32 %v619
    %vm750 = vweird.f32 %v743
    %vm751 = vmor %vm749, %vm750
    %v752 = vsel %vm751, %v743, %v748
    %v753 = vrsqrt.pop %v620
    %v754 = vmul.f32 %v753, %v620
    %v755 = vmul.f32 %v754, %v753
    %v756 = vmul.f32 0.5, %v755
    %v757 = vsub.f32 1.5, %v756
    %v758 = vmul.f32 %v753, %v757
    %vm759 = vweird.f32 %v620
    %vm760 = vweird.f32 %v753
    %vm761 = vmor %vm759, %vm760
    %v762 = vsel %vm761, %v753, %v758
    %v763 = vrsqrt.pop %v621
    %v764 = vmul.f32 %v763, %v621
    %v765 = vmul.f32 %v764, %v763
    %v766 = vmul.f32 0.5, %v765
    %v767 = vsub.f32 1.5, %v766
    %v768 = vmul.f32 %v763, %v767
    %vm769 = vweird.f32 %v621
    %vm770 = vweird.f32 %v763
    %vm771 = vmor %vm769, %vm770
    %v772 = vsel %vm771, %v763, %v768
    %v773 = vrsqrt.pop %v622
    %v774 = vmul.f32 %v773, %v622
    %v775 = vmul.f32 %v774, %v773
    %v776 = vmul.f32 0.5, %v775
    %v777 = vsub.f32 1.5, %v776
    %v778 = vmul.f32 %v773, %v777
    %vm779 = vweird.f32 %v622
    %vm780 = vweird.f32 %v773
    %vm781 = vmor %vm779, %vm780
    %v782 = vsel %vm781, %v773, %v778
    %v783 = vmul.f32 %v543, %v632
    %v784 = vmul.f32 %v544, %v642
    %v785 = vmul.f32 %v545, %v652
    %v786 = vmul.f32 %v546, %v662
    %v787 = vmul.f32 %v547, %v672
    %v788 = vmul.f32 %v548, %v682
    %v789 = vmul.f32 %v549, %v692
    %v790 = vmul.f32 %v550, %v702
    %v791 = vmul.f32 %v551, %v712
    %v792 = vmul.f32 %v552, %v722
    %v793 = vmul.f32 %v553, %v732
    %v794 = vmul.f32 %v554, %v742
    %v795 = vmul.f32 %v555, %v752
    %v796 = vmul.f32 %v556, %v762
    %v797 = vmul.f32 %v557, %v772
    %v798 = vmul.f32 %v558, %v782
    %v799 = vmax.f32 %v783, 0.0
    %v800 = vmax.f32 %v784, 0.0
    %v801 = vmax.f32 %v785, 0.0
    %v802 = vmax.f32 %v786, 0.0
    %v803 = vmax.f32 %v787, 0.0
    %v804 = vmax.f32 %v788, 0.0
    %v805 = vmax.f32 %v789, 0.0
    %v806 = vmax.f32 %v790, 0.0
    %v807 = vmax.f32 %v791, 0.0
    %v808 = vmax.f32 %v792, 0.0
    %v809 = vmax.f32 %v793, 0.0
    %v810 = vmax.f32 %v794, 0.0
    %v811 = vmax.f32 %v795, 0.0
    %v812 = vmax.f32 %v796, 0.0
    %v813 = vmax.f32 %v797, 0.0
    %v814 = vmax.f32 %v798, 0.0
    %v815 = vpack.c.bf16 %v799, %v799
    %v816 = vpack.c.bf16 %v800, %v800
    %v817 = vpack.c.bf16 %v801, %v801
    %v818 = vpack.c.bf16 %v802, %v802
    %v819 = vpack.c.bf16 %v803, %v803
    %v820 = vpack.c.bf16 %v804, %v804
    %v821 = vpack.c.bf16 %v805, %v805
    %v822 = vpack.c.bf16 %v806, %v806
    %v823 = vpack.c.bf16 %v807, %v807
    %v824 = vpack.c.bf16 %v808, %v808
    %v825 = vpack.c.bf16 %v809, %v809
    %v826 = vpack.c.bf16 %v810, %v810
    %v827 = vpack.c.bf16 %v811, %v811
    %v828 = vpack.c.bf16 %v812, %v812
    %v829 = vpack.c.bf16 %v813, %v813
    %v830 = vpack.c.bf16 %v814, %v814
    %831 = vst [vmem:[%s5] sm:$0xf] %v815
    %832 = vst [vmem:[%s5 + $0x4] sm:$0xf] %v816
    %833 = vst [vmem:[%s5 + $0x8] sm:$0xf] %v817
    %834 = vst [vmem:[%s5 + $0xc] sm:$0xf] %v818
    %835 = vst [vmem:[%s5 + $0x10] sm:$0xf] %v819
    %836 = vst [vmem:[%s5 + $0x14] sm:$0xf] %v820
    %837 = vst [vmem:[%s5 + $0x18] sm:$0xf] %v821
    %838 = vst [vmem:[%s5 + $0x1c] sm:$0xf] %v822
    %839 = vst [vmem:[%s5 + $0x20] sm:$0xf] %v823
    %840 = vst [vmem:[%s5 + $0x24] sm:$0xf] %v824
    %841 = vst [vmem:[%s5 + $0x28] sm:$0xf] %v825
    %842 = vst [vmem:[%s5 + $0x2c] sm:$0xf] %v826
    %843 = vst [vmem:[%s5 + $0x30] sm:$0xf] %v827
    %844 = vst [vmem:[%s5 + $0x34] sm:$0xf] %v828
    %845 = vst [vmem:[%s5 + $0x38] sm:$0xf] %v829
    %846 = vst [vmem:[%s5 + $0x3c] sm:$0xf] %v830
    // Predicated region
    $region30: #{graphsage_forward.3} parent=1 // pred_check
      _
    $region31: #{graphsage_forward.3} parent=1 // pred_check_branch
      %848 = sbr.rel (0) target = $region33
    $region32: #{graphsage_forward.3} parent=1 // pred_region
      _
    $region33: #{graphsage_forward.3} parent=1 // pred_fallthru
      _
    // Predicated region
    $region34: #{graphsage_forward.3} parent=1 // pred_check
      _
    $region35: #{graphsage_forward.3} parent=1 // pred_check_branch
      %850 = sbr.rel (0) target = $region37
    $region36: #{graphsage_forward.3} parent=1 // pred_region
      _
    $region37: #{graphsage_forward.3} parent=1 // pred_fallthru
      _
    %851 = vsyncpa [#allocation3], 1
    %852 = vsyncpa [#allocation5], 1

</llo_original>
